<compile_context>
chip_gen: v7x
topology: tpu7x:2x2x1
jax: 0.10.0
libtpu: 0.0.40
codegen_flags: <defaults>
</compile_context>

<pallas_src>
import jax
import jax.numpy as jnp
from jax import lax
from jax.experimental import pallas as pl
from jax.experimental.pallas import tpu as pltpu

EPS = 1e-5


# ------------------------------ Pallas kernel ------------------------------- #

def _make_decoder_kernel(hh, tap_split):
    """Builds the fused conv1 -> deconv2 (parity split) -> conv3 kernel."""

    def kernel(x_ref, xh_ref, w1_ref, b1_ref, w2_ref, b2_ref, w3_ref, b3_ref,
               o_ref):
        _, th, ww, cin = x_ref.shape
        mid = w1_ref.shape[1]
        nfil = w3_ref.shape[1]
        f32 = jnp.float32
        cdt = w1_ref.dtype          # MXU compute dtype (bf16)
        odt = o_ref.dtype           # output dtype (bf16)

        # ---- conv1 (1x1) + BN1 + ReLU on the strip ----
        x = x_ref[...].reshape(th * ww, cin)
        h1 = jnp.dot(x, w1_ref[...], preferred_element_type=f32) + b1_ref[...]
        h1 = jnp.maximum(h1, 0.0).astype(cdt).reshape(th, ww, mid)

        # Mask rows beyond the image (only the remainder strip when H % th
        # != 0).  Their inputs are padding garbage and their outputs are
        # dropped by Pallas, but they must not leak into the +1-row shift of
        # the last valid row.
        if hh % th != 0:
            valid = hh - pl.program_id(1) * th
            row_ids = lax.broadcasted_iota(jnp.int32, (th, ww), 0)
            h1 = jnp.where((row_ids < valid)[:, :, None], h1, 0.0)

        # ---- conv1 on the one-row halo (first row of the next strip) ----
        xh = xh_ref[...].reshape(ww, cin)
        h1n = jnp.dot(xh, w1_ref[...], preferred_element_type=f32) + b1_ref[...]
        h1n = jnp.maximum(h1n, 0.0)
        has_next = pl.program_id(1) + 1 < pl.num_programs(1)
        h1n = jnp.where(has_next, h1n, 0.0).astype(cdt).reshape(1, ww, mid)

        # ---- shifted neighbour views (bf16, zero beyond the image) ----
        # x10[i, j] = h1[i+1, j] ; x01[i, j] = h1[i, j+1] ; x11 = both shifts.
        if th > 1:
            x10 = jnp.concatenate([h1[1:], h1n], axis=0)
        else:
            x10 = h1n
        zcol = jnp.zeros((th, 1, mid), cdt)
        x01 = jnp.concatenate([h1[:, 1:, :], zcol], axis=1)
        x11 = jnp.concatenate([x10[:, 1:, :], zcol], axis=1)

        rows = th * ww
        h1f = h1.reshape(rows, mid)
        x01f = x01.reshape(rows, mid)
        x10f = x10.reshape(rows, mid)
        x11f = x11.reshape(rows, mid)

        # ---- deconv2 by output parity + BN2 + ReLU ----
        #   a00 = h1.w11
        #   a01 = h1.w12 + x01.w10
        #   a10 = h1.w21 + x10.w01
        #   a11 = h1.w22 + x01.w20 + x10.w02 + x11.w00
        if tap_split:
            # 128x128-MXU chips: 9 non-zero tap matmuls, f32 accumulation.
            w2 = w2_ref[...]
            ac = jnp.dot(h1f, w2[:, :4 * mid], preferred_element_type=f32)
            ac = ac + b2_ref[...]
            ar = jnp.dot(x01f, w2[:, 4 * mid:6 * mid], preferred_element_type=f32)
            ad = jnp.dot(x10f, w2[:, 6 * mid:8 * mid], preferred_element_type=f32)
            ax = jnp.dot(x11f, w2[:, 8 * mid:], preferred_element_type=f32)
            a = jnp.concatenate([
                ac[:, :mid],
                ac[:, mid:2 * mid] + ar[:, :mid],
                ac[:, 2 * mid:3 * mid] + ad[:, :mid],
                ac[:, 3 * mid:] + ar[:, mid:] + ad[:, mid:] + ax,
            ], axis=-1)
        else:
            # 256x256-MXU chips: one dense block matmul (K = 4*mid).
            xcat = jnp.concatenate([h1f, x01f, x10f, x11f], axis=-1)
            a = jnp.dot(xcat, w2_ref[...], preferred_element_type=f32)
            a = a + b2_ref[...]
        h2 = jnp.maximum(a, 0.0).astype(cdt)              # [a00|a01|a10|a11]

        # ---- conv3 (1x1) + BN3 + ReLU per parity plane (bf16 results) ----
        w3 = w3_ref[...]
        b3 = b3_ref[...]
        z = [None] * 4
        for k in range(4):
            zk = jnp.dot(h2[:, k * mid:(k + 1) * mid], w3,
                         preferred_element_type=f32) + b3
            z[k] = jnp.maximum(zk, 0.0).astype(odt)

        # ---- row-parity de-interleave into the output block ----
        # Even output rows hold [a00 | a01] per input column, odd rows hold
        # [a10 | a11]; the W de-interleave is a free reshape in the wrapper.
        even = jnp.concatenate([z[0], z[1]], axis=-1).reshape(th, ww, 2 * nfil)
        odd = jnp.concatenate([z[2], z[3]], axis=-1).reshape(th, ww, 2 * nfil)
        out = jnp.stack([even, odd], axis=1)              # (th, 2, ww, 2*nfil)
        o_ref[...] = out.reshape(1, 2 * th, ww, 2 * nfil)

    return kernel


# ------------------------------ Parameters ---------------------------------- #

def init_params(key, in_channels, n_filters):
    mid = in_channels // 4
    ks = jax.random.split(key, 16)

    def uniform(k, shape, fan_in):
        bound = 1.0 / jnp.sqrt(jnp.float32(fan_in))
        return jax.random.uniform(k, shape, jnp.float32, -bound, bound)

    def bn_params(k, c):
        k1, k2, k3, k4 = jax.random.split(k, 4)
        return dict(
            gamma=1.0 + 0.1 * jax.random.normal(k1, (c,), jnp.float32),
            beta=0.1 * jax.random.normal(k2, (c,), jnp.float32),
            mean=0.1 * jax.random.normal(k3, (c,), jnp.float32),
            var=0.5 + jax.random.uniform(k4, (c,), jnp.float32),
        )

    return dict(
        conv1_w=uniform(ks[0], (mid, in_channels, 1, 1), in_channels),   # OIHW
        conv1_b=uniform(ks[1], (mid,), in_channels),
        bn1=bn_params(ks[2], mid),
        deconv2_w=uniform(ks[3], (mid, mid, 3, 3), mid * 9),             # (I,O,kH,kW)
        deconv2_b=uniform(ks[4], (mid,), mid * 9),
        bn2=bn_params(ks[5], mid),
        conv3_w=uniform(ks[6], (n_filters, mid, 1, 1), mid),             # OIHW
        conv3_b=uniform(ks[7], (n_filters,), mid),
        bn3=bn_params(ks[8], n_filters),
    )


def _fold_bn(bn, conv_b):
    scale = bn["gamma"] / jnp.sqrt(bn["var"] + EPS)
    shift = (conv_b - bn["mean"]) * scale + bn["beta"]
    return scale, shift


def _vmem_capacity_bytes():
    try:
        return int(pltpu.get_tpu_info().vmem_capacity_bytes)
    except Exception:
        return 64 * 2**20          # conservative (v7x-sized) fallback


def _small_mxu_chip():
    """True on 128x128-MXU generations (<= v5), where the 9-tap deconv split
    beats the zero-padded dense (4*mid, 4*mid) pack."""
    try:
        kind = jax.devices()[0].device_kind.lower()
    except Exception:
        return False
    return any(g in kind for g in ("v2", "v3", "v4", "v5"))


def _pick_strip_rows(hh, ww, cin, mid, nfil, budget_bytes, max_rows=None):
    # Per-input-row VMEM footprint: double-buffered bf16 input / output tiles,
    # bf16 h1 + shifted views + h2, f32 deconv / conv3 accumulators.
    per_row = ww * (4 * cin + 48 * mid + 48 * nfil) + 1
    th = max(1, int(budget_bytes) // per_row)
    if max_rows is not None:
        th = min(th, int(max_rows))
    if th >= hh:
        return int(hh)
    if th >= 8:
        th = (th // 8) * 8                                # sublane friendly
    return int(th)


# ------------------------------ Forward pass -------------------------------- #

def decoder_block_forward(x_nchw, p, *, tap_split=None, max_strip_rows=None):
    n, cin, hh, ww = x_nchw.shape
    mid = p["conv1_w"].shape[0]
    nfil = p["conv3_w"].shape[0]
    cdt = jnp.bfloat16

    if tap_split is None:
        tap_split = _small_mxu_chip()
    tap_split = bool(tap_split)

    # ---- fold BatchNorm (inference) into conv weights / biases ----
    s1, sh1 = _fold_bn(p["bn1"], p["conv1_b"])
    s2, sh2 = _fold_bn(p["bn2"], p["deconv2_b"])
    s3, sh3 = _fold_bn(p["bn3"], p["conv3_b"])

    w1 = (jnp.transpose(p["conv1_w"][:, :, 0, 0], (1, 0)) * s1[None, :]).astype(cdt)
    w3 = (jnp.transpose(p["conv3_w"][:, :, 0, 0], (1, 0)) * s3[None, :]).astype(cdt)

    # ConvTranspose2d(3,3,s=2,p=1,op=1) decomposed by output parity:
    #   out[2i,  2j  ] = x[i,j].w11
    #   out[2i,  2j+1] = x[i,j].w12 + x[i,j+1].w10
    #   out[2i+1,2j  ] = x[i,j].w21 + x[i+1,j].w01
    #   out[2i+1,2j+1] = x[i,j].w22 + x[i,j+1].w20 + x[i+1,j].w02 + x[i+1,j+1].w00
    w2 = jnp.transpose(p["deconv2_w"], (2, 3, 0, 1)) * s2[None, None, None, :]
    if tap_split:
        # [w11|w12|w21|w22 | w10|w20 | w01|w02 | w00]  -> (mid, 9*mid)
        w2p = jnp.concatenate(
            [w2[1, 1], w2[1, 2], w2[2, 1], w2[2, 2],
             w2[1, 0], w2[2, 0], w2[0, 1], w2[0, 2], w2[0, 0]],
            axis=1).astype(cdt)
    else:
        # Dense block matrix: rows [h1|x01|x10|x11], cols [a00|a01|a10|a11].
        zz = jnp.zeros((mid, mid), jnp.float32)
        w2p = jnp.concatenate([
            jnp.concatenate([w2[1, 1], w2[1, 2], w2[2, 1], w2[2, 2]], axis=1),
            jnp.concatenate([zz,       w2[1, 0], zz,       w2[2, 0]], axis=1),
            jnp.concatenate([zz,       zz,       w2[0, 1], w2[0, 2]], axis=1),
            jnp.concatenate([zz,       zz,       zz,       w2[0, 0]], axis=1),
        ], axis=0).astype(cdt)

    b1 = sh1[None, :]                                     # fp32 shifts
    b2 = jnp.tile(sh2, 4)[None, :]
    b3 = sh3[None, :]

    # ---- strip tiling over H (one-row halo, masked remainder strip) ----
    vmem_cap = _vmem_capacity_bytes()
    budget = max(2 * 2**20, min(24 * 2**20, vmem_cap // 5))
    th = _pick_strip_rows(hh, ww, cin, mid, nfil, budget, max_strip_rows)
    ns = pl.cdiv(hh, th)

    xb = jnp.transpose(x_nchw, (0, 2, 3, 1)).astype(cdt)  # NHWC, bf16

    kernel = _make_decoder_kernel(hh, tap_split)

    out_packed = pl.pallas_call(
        kernel,
        out_shape=jax.ShapeDtypeStruct((n, 2 * hh, ww, 2 * nfil), cdt),
        grid=(n, ns),
        in_specs=[
            pl.BlockSpec((1, th, ww, cin), lambda i, s: (i, s, 0, 0)),
            # Halo: first row of the next strip, read straight from the input
            # (clamped on the last strip and masked in-kernel via has_next).
            pl.BlockSpec((1, 1, ww, cin),
                         lambda i, s: (i, jnp.minimum((s + 1) * th, hh - 1), 0, 0)),
            pl.BlockSpec(w1.shape, lambda i, s: (0, 0)),
            pl.BlockSpec(b1.shape, lambda i, s: (0, 0)),
            pl.BlockSpec(w2p.shape, lambda i, s: (0, 0)),
            pl.BlockSpec(b2.shape, lambda i, s: (0, 0)),
            pl.BlockSpec(w3.shape, lambda i, s: (0, 0)),
            pl.BlockSpec(b3.shape, lambda i, s: (0, 0)),
        ],
        out_specs=pl.BlockSpec((1, 2 * th, ww, 2 * nfil),
                               lambda i, s: (i, s, 0, 0)),
        compiler_params=pltpu.CompilerParams(
            # Strips are independent -> both axes parallel (megacore / v7x).
            dimension_semantics=("parallel", "parallel"),
            vmem_limit_bytes=int(min(vmem_cap * 3 // 4, 96 * 2**20)),
        ),
    )(xb, xb, w1, b1, w2p, b2, w3, b3)

    # W-parity de-interleave is a pure row-major regroup (free); finish with
    # the NCHW transpose that the PyTorch module's callers expect.
    y = out_packed.reshape(n, 2 * hh, 2 * ww, nfil)
    return jnp.transpose(y, (0, 3, 1, 2)).astype(jnp.float32)


# --------------------------- Pure-JAX reference ----------------------------- #

def decoder_block_reference(x_nchw, p):
    def bn(y, b):
        g, bt, m, v = b["gamma"], b["beta"], b["mean"], b["var"]
        return ((y - m[None, :, None, None]) / jnp.sqrt(v + EPS)[None, :, None, None]
                * g[None, :, None, None] + bt[None, :, None, None])

    y = jnp.einsum("nchw,oc->nohw", x_nchw, p["conv1_w"][:, :, 0, 0])
    y = y + p["conv1_b"][None, :, None, None]
    y = jax.nn.relu(bn(y, p["bn1"]))

    # ConvTranspose2d via lhs-dilated correlation with spatially flipped kernel.
    rhs = jnp.transpose(p["deconv2_w"][:, :, ::-1, ::-1], (2, 3, 0, 1))  # HWIO
    y_nhwc = jnp.transpose(y, (0, 2, 3, 1))
    z = lax.conv_general_dilated(
        y_nhwc, rhs, window_strides=(1, 1), padding=((1, 2), (1, 2)),
        lhs_dilation=(2, 2), dimension_numbers=("NHWC", "HWIO", "NHWC"))
    z = jnp.transpose(z, (0, 3, 1, 2)) + p["deconv2_b"][None, :, None, None]
    z = jax.nn.relu(bn(z, p["bn2"]))

    o = jnp.einsum("nchw,oc->nohw", z, p["conv3_w"][:, :, 0, 0])
    o = o + p["conv3_b"][None, :, None, None]
    o = jax.nn.relu(bn(o, p["bn3"]))
    return o


# ---------------------------------- Main ------------------------------------ #

if __name__ == "__main__":
    key = jax.random.PRNGKey(0)

    fwd = jax.jit(decoder_block_forward,
                  static_argnames=("tap_split", "max_strip_rows"))

    # (in_channels, n_filters, N, H, W, tap_split, max_strip_rows)
    cases = [
        (16, 8, 2, 16, 16, False, None),  # dense packed deconv (v6e/v7x path)
        (16, 8, 1, 10, 16, True, 4),      # tap split + multi strip + masked remainder
        (16, 8, 2, 16, 16, None, None),   # generation auto-detected path
    ]

    for cin, nf, n, h, w, tap, msr in cases:
        key, kx, kp = jax.random.split(key, 3)
        x = jax.random.normal(kx, (n, cin, h, w), jnp.float32)
        params = init_params(kp, cin, nf)

        out = jax.block_until_ready(
            fwd(x, params, tap_split=tap, max_strip_rows=msr))
        assert out.shape == (n, nf, 2 * h, 2 * w), out.shape

        ref = jax.block_until_ready(decoder_block_reference(x, params))
        max_err = float(jnp.max(jnp.abs(out - ref)))
        # bf16 MXU path + bf16 output (fp32 accumulate) -> loose tolerance.
        assert jnp.allclose(out, ref, atol=5e-2, rtol=5e-2), max_err

    print("KERNEL_OK")
</pallas_src>

<mosaic_0001>
module attributes {stable_mosaic.version = 11 : i64} {
  func.func @kernel(%arg0: i32, %arg1: i32, %arg2: memref<1x16x16x16xbf16, #tpu.memory_space<vmem>>, %arg3: memref<1x1x16x16xbf16, #tpu.memory_space<vmem>>, %arg4: memref<16x4xbf16, #tpu.memory_space<vmem>>, %arg5: memref<1x4xf32, #tpu.memory_space<vmem>>, %arg6: memref<16x16xbf16, #tpu.memory_space<vmem>>, %arg7: memref<1x16xf32, #tpu.memory_space<vmem>>, %arg8: memref<4x8xbf16, #tpu.memory_space<vmem>>, %arg9: memref<1x8xf32, #tpu.memory_space<vmem>>, %arg10: memref<1x32x16x16xbf16, #tpu.memory_space<vmem>>) attributes {dimension_semantics = [#tpu.dimension_semantics<parallel>, #tpu.dimension_semantics<parallel>], iteration_bounds = array<i64: 2, 1>, scalar_prefetch = 0 : i64, scratch_operands = 0 : i64, tpu.core_type = #tpu.core_type<tc>, window_params = [{transform_indices = @transform_0, window_bounds = array<i64: 1, 16, 16, 16>}, {transform_indices = @transform_1, window_bounds = array<i64: 1, 1, 16, 16>}, {pipeline_mode = #tpu.pipeline_mode<synchronous>, transform_indices = @transform_2, window_bounds = array<i64: 16, 4>}, {pipeline_mode = #tpu.pipeline_mode<synchronous>, transform_indices = @transform_3, window_bounds = array<i64: 1, 4>}, {pipeline_mode = #tpu.pipeline_mode<synchronous>, transform_indices = @transform_4, window_bounds = array<i64: 16, 16>}, {pipeline_mode = #tpu.pipeline_mode<synchronous>, transform_indices = @transform_5, window_bounds = array<i64: 1, 16>}, {pipeline_mode = #tpu.pipeline_mode<synchronous>, transform_indices = @transform_6, window_bounds = array<i64: 4, 8>}, {pipeline_mode = #tpu.pipeline_mode<synchronous>, transform_indices = @transform_7, window_bounds = array<i64: 1, 8>}, {transform_indices = @transform_8, window_bounds = array<i64: 1, 32, 16, 16>}]} {
    %c0 = arith.constant 0 : index
    %c0_0 = arith.constant 0 : index
    %c0_1 = arith.constant 0 : index
    %c0_2 = arith.constant 0 : index
    %0 = vector.load %arg2[%c0, %c0_0, %c0_1, %c0_2] : memref<1x16x16x16xbf16, #tpu.memory_space<vmem>>, vector<1x16x16x16xbf16>
    %1 = vector.shape_cast %0 : vector<1x16x16x16xbf16> to vector<256x16xbf16>
    %c0_3 = arith.constant 0 : index
    %c0_4 = arith.constant 0 : index
    %2 = vector.load %arg4[%c0_3, %c0_4] : memref<16x4xbf16, #tpu.memory_space<vmem>>, vector<16x4xbf16>
    %cst = arith.constant dense<0.000000e+00> : vector<256x4xf32>
    %3 = tpu.matmul %1, %2, %cst {dimension_numbers = #tpu.dot_dimension_numbers<[1], [0], [0], [1], [0, 0, 1, 1], [], []>} : vector<256x16xbf16>, vector<16x4xbf16>, vector<256x4xf32> -> vector<256x4xf32>
    %c0_5 = arith.constant 0 : index
    %c0_6 = arith.constant 0 : index
    %4 = vector.load %arg5[%c0_5, %c0_6] : memref<1x4xf32, #tpu.memory_space<vmem>>, vector<1x4xf32>
    %5 = vector.broadcast %4 : vector<1x4xf32> to vector<256x4xf32>
    %6 = arith.addf %3, %5 : vector<256x4xf32>
    %cst_7 = arith.constant 0.000000e+00 : f32
    %7 = vector.broadcast %cst_7 : f32 to vector<256x4xf32>
    %8 = arith.maximumf %6, %7 : vector<256x4xf32>
    %9 = arith.truncf %8 : vector<256x4xf32> to vector<256x4xbf16>
    %10 = vector.shape_cast %9 : vector<256x4xbf16> to vector<16x16x4xbf16>
    %c0_8 = arith.constant 0 : index
    %c0_9 = arith.constant 0 : index
    %c0_10 = arith.constant 0 : index
    %c0_11 = arith.constant 0 : index
    %11 = vector.load %arg3[%c0_8, %c0_9, %c0_10, %c0_11] : memref<1x1x16x16xbf16, #tpu.memory_space<vmem>>, vector<1x1x16x16xbf16>
    %12 = vector.shape_cast %11 : vector<1x1x16x16xbf16> to vector<16x16xbf16>
    %c0_12 = arith.constant 0 : index
    %c0_13 = arith.constant 0 : index
    %13 = vector.load %arg4[%c0_12, %c0_13] : memref<16x4xbf16, #tpu.memory_space<vmem>>, vector<16x4xbf16>
    %cst_14 = arith.constant dense<0.000000e+00> : vector<16x4xf32>
    %14 = tpu.matmul %12, %13, %cst_14 {dimension_numbers = #tpu.dot_dimension_numbers<[1], [0], [0], [1], [0, 0, 1, 1], [], []>} : vector<16x16xbf16>, vector<16x4xbf16>, vector<16x4xf32> -> vector<16x4xf32>
    %c0_15 = arith.constant 0 : index
    %c0_16 = arith.constant 0 : index
    %15 = vector.load %arg5[%c0_15, %c0_16] : memref<1x4xf32, #tpu.memory_space<vmem>>, vector<1x4xf32>
    %16 = vector.broadcast %15 : vector<1x4xf32> to vector<16x4xf32>
    %17 = arith.addf %14, %16 : vector<16x4xf32>
    %cst_17 = arith.constant 0.000000e+00 : f32
    %18 = vector.broadcast %cst_17 : f32 to vector<16x4xf32>
    %19 = arith.maximumf %17, %18 : vector<16x4xf32>
    %c1_i32 = arith.constant 1 : i32
    %20 = arith.addi %arg1, %c1_i32 : i32
    %c1_i32_18 = arith.constant 1 : i32
    %21 = arith.cmpi slt, %20, %c1_i32_18 : i32
    %cst_19 = arith.constant 0.000000e+00 : f32
    %22 = vector.broadcast %cst_19 : f32 to vector<16x4xf32>
    %23 = arith.select %21, %19, %22 : vector<16x4xf32>
    %24 = arith.truncf %23 : vector<16x4xf32> to vector<16x4xbf16>
    %25 = vector.shape_cast %24 : vector<16x4xbf16> to vector<1x16x4xbf16>
    %26 = vector.extract_strided_slice %10 {offsets = [1, 0, 0], sizes = [15, 16, 4], strides = [1, 1, 1]} : vector<16x16x4xbf16> to vector<15x16x4xbf16>
    %27 = tpu.concatenate %26, %25 in 0 : vector<15x16x4xbf16>, vector<1x16x4xbf16> -> vector<16x16x4xbf16>
    %cst_20 = arith.constant 0.000000e+00 : bf16
    %28 = vector.broadcast %cst_20 : bf16 to vector<16x1x4xbf16>
    %29 = vector.extract_strided_slice %10 {offsets = [0, 1, 0], sizes = [16, 15, 4], strides = [1, 1, 1]} : vector<16x16x4xbf16> to vector<16x15x4xbf16>
    %30 = tpu.concatenate %29, %28 in 1 : vector<16x15x4xbf16>, vector<16x1x4xbf16> -> vector<16x16x4xbf16>
    %31 = vector.extract_strided_slice %27 {offsets = [0, 1, 0], sizes = [16, 15, 4], strides = [1, 1, 1]} : vector<16x16x4xbf16> to vector<16x15x4xbf16>
    %32 = tpu.concatenate %31, %28 in 1 : vector<16x15x4xbf16>, vector<16x1x4xbf16> -> vector<16x16x4xbf16>
    %33 = vector.shape_cast %10 : vector<16x16x4xbf16> to vector<256x4xbf16>
    %34 = vector.shape_cast %30 : vector<16x16x4xbf16> to vector<256x4xbf16>
    %35 = vector.shape_cast %27 : vector<16x16x4xbf16> to vector<256x4xbf16>
    %36 = vector.shape_cast %32 : vector<16x16x4xbf16> to vector<256x4xbf16>
    %37 = tpu.concatenate %33, %34, %35, %36 in 1 : vector<256x4xbf16>, vector<256x4xbf16>, vector<256x4xbf16>, vector<256x4xbf16> -> vector<256x16xbf16>
    %c0_21 = arith.constant 0 : index
    %c0_22 = arith.constant 0 : index
    %38 = vector.load %arg6[%c0_21, %c0_22] : memref<16x16xbf16, #tpu.memory_space<vmem>>, vector<16x16xbf16>
    %cst_23 = arith.constant dense<0.000000e+00> : vector<256x16xf32>
    %39 = tpu.matmul %37, %38, %cst_23 {dimension_numbers = #tpu.dot_dimension_numbers<[1], [0], [0], [1], [0, 0, 1, 1], [], []>} : vector<256x16xbf16>, vector<16x16xbf16>, vector<256x16xf32> -> vector<256x16xf32>
    %c0_24 = arith.constant 0 : index
    %c0_25 = arith.constant 0 : index
    %40 = vector.load %arg7[%c0_24, %c0_25] : memref<1x16xf32, #tpu.memory_space<vmem>>, vector<1x16xf32>
    %41 = vector.broadcast %40 : vector<1x16xf32> to vector<256x16xf32>
    %42 = arith.addf %39, %41 : vector<256x16xf32>
    %cst_26 = arith.constant 0.000000e+00 : f32
    %43 = vector.broadcast %cst_26 : f32 to vector<256x16xf32>
    %44 = arith.maximumf %42, %43 : vector<256x16xf32>
    %45 = arith.truncf %44 : vector<256x16xf32> to vector<256x16xbf16>
    %c0_27 = arith.constant 0 : index
    %c0_28 = arith.constant 0 : index
    %46 = vector.load %arg8[%c0_27, %c0_28] : memref<4x8xbf16, #tpu.memory_space<vmem>>, vector<4x8xbf16>
    %c0_29 = arith.constant 0 : index
    %c0_30 = arith.constant 0 : index
    %47 = vector.load %arg9[%c0_29, %c0_30] : memref<1x8xf32, #tpu.memory_space<vmem>>, vector<1x8xf32>
    %48 = vector.extract_strided_slice %45 {offsets = [0, 0], sizes = [256, 4], strides = [1, 1]} : vector<256x16xbf16> to vector<256x4xbf16>
    %cst_31 = arith.constant dense<0.000000e+00> : vector<256x8xf32>
    %49 = tpu.matmul %48, %46, %cst_31 {dimension_numbers = #tpu.dot_dimension_numbers<[1], [0], [0], [1], [0, 0, 1, 1], [], []>} : vector<256x4xbf16>, vector<4x8xbf16>, vector<256x8xf32> -> vector<256x8xf32>
    %50 = vector.broadcast %47 : vector<1x8xf32> to vector<256x8xf32>
    %51 = arith.addf %49, %50 : vector<256x8xf32>
    %cst_32 = arith.constant 0.000000e+00 : f32
    %52 = vector.broadcast %cst_32 : f32 to vector<256x8xf32>
    %53 = arith.maximumf %51, %52 : vector<256x8xf32>
    %54 = arith.truncf %53 : vector<256x8xf32> to vector<256x8xbf16>
    %55 = vector.extract_strided_slice %45 {offsets = [0, 4], sizes = [256, 4], strides = [1, 1]} : vector<256x16xbf16> to vector<256x4xbf16>
    %cst_33 = arith.constant dense<0.000000e+00> : vector<256x8xf32>
    %56 = tpu.matmul %55, %46, %cst_33 {dimension_numbers = #tpu.dot_dimension_numbers<[1], [0], [0], [1], [0, 0, 1, 1], [], []>} : vector<256x4xbf16>, vector<4x8xbf16>, vector<256x8xf32> -> vector<256x8xf32>
    %57 = vector.broadcast %47 : vector<1x8xf32> to vector<256x8xf32>
    %58 = arith.addf %56, %57 : vector<256x8xf32>
    %cst_34 = arith.constant 0.000000e+00 : f32
    %59 = vector.broadcast %cst_34 : f32 to vector<256x8xf32>
    %60 = arith.maximumf %58, %59 : vector<256x8xf32>
    %61 = arith.truncf %60 : vector<256x8xf32> to vector<256x8xbf16>
    %62 = vector.extract_strided_slice %45 {offsets = [0, 8], sizes = [256, 4], strides = [1, 1]} : vector<256x16xbf16> to vector<256x4xbf16>
    %cst_35 = arith.constant dense<0.000000e+00> : vector<256x8xf32>
    %63 = tpu.matmul %62, %46, %cst_35 {dimension_numbers = #tpu.dot_dimension_numbers<[1], [0], [0], [1], [0, 0, 1, 1], [], []>} : vector<256x4xbf16>, vector<4x8xbf16>, vector<256x8xf32> -> vector<256x8xf32>
    %64 = vector.broadcast %47 : vector<1x8xf32> to vector<256x8xf32>
    %65 = arith.addf %63, %64 : vector<256x8xf32>
    %cst_36 = arith.constant 0.000000e+00 : f32
    %66 = vector.broadcast %cst_36 : f32 to vector<256x8xf32>
    %67 = arith.maximumf %65, %66 : vector<256x8xf32>
    %68 = arith.truncf %67 : vector<256x8xf32> to vector<256x8xbf16>
    %69 = vector.extract_strided_slice %45 {offsets = [0, 12], sizes = [256, 4], strides = [1, 1]} : vector<256x16xbf16> to vector<256x4xbf16>
    %cst_37 = arith.constant dense<0.000000e+00> : vector<256x8xf32>
    %70 = tpu.matmul %69, %46, %cst_37 {dimension_numbers = #tpu.dot_dimension_numbers<[1], [0], [0], [1], [0, 0, 1, 1], [], []>} : vector<256x4xbf16>, vector<4x8xbf16>, vector<256x8xf32> -> vector<256x8xf32>
    %71 = vector.broadcast %47 : vector<1x8xf32> to vector<256x8xf32>
    %72 = arith.addf %70, %71 : vector<256x8xf32>
    %cst_38 = arith.constant 0.000000e+00 : f32
    %73 = vector.broadcast %cst_38 : f32 to vector<256x8xf32>
    %74 = arith.maximumf %72, %73 : vector<256x8xf32>
    %75 = arith.truncf %74 : vector<256x8xf32> to vector<256x8xbf16>
    %76 = tpu.concatenate %54, %61 in 1 : vector<256x8xbf16>, vector<256x8xbf16> -> vector<256x16xbf16>
    %77 = vector.shape_cast %76 : vector<256x16xbf16> to vector<16x16x16xbf16>
    %78 = tpu.concatenate %68, %75 in 1 : vector<256x8xbf16>, vector<256x8xbf16> -> vector<256x16xbf16>
    %79 = vector.shape_cast %78 : vector<256x16xbf16> to vector<16x16x16xbf16>
    %80 = vector.shape_cast %77 : vector<16x16x16xbf16> to vector<16x1x16x16xbf16>
    %81 = vector.shape_cast %79 : vector<16x16x16xbf16> to vector<16x1x16x16xbf16>
    %82 = tpu.concatenate %80, %81 in 1 : vector<16x1x16x16xbf16>, vector<16x1x16x16xbf16> -> vector<16x2x16x16xbf16>
    %83 = vector.shape_cast %82 : vector<16x2x16x16xbf16> to vector<1x32x16x16xbf16>
    %c0_39 = arith.constant 0 : index
    %c0_40 = arith.constant 0 : index
    %c0_41 = arith.constant 0 : index
    %c0_42 = arith.constant 0 : index
    %84 = vector.load %arg10[%c0_39, %c0_40, %c0_41, %c0_42] : memref<1x32x16x16xbf16, #tpu.memory_space<vmem>>, vector<1x32x16x16xbf16>
    tpu.vector_store %arg10[%c0_39, %c0_40, %c0_41, %c0_42], %83 {strides = array<i32>} : memref<1x32x16x16xbf16, #tpu.memory_space<vmem>>, vector<1x32x16x16xbf16>,
    return
  }
  func.func @transform_0(%arg0: i32, %arg1: i32) -> (i32, i32, i32, i32) {
    %c0_i32 = arith.constant 0 : i32
    %c0_i32_0 = arith.constant 0 : i32
    %c0_i32_1 = arith.constant 0 : i32
    return %arg0, %arg1, %c0_i32, %c0_i32_0 : i32, i32, i32, i32
  }
  func.func @transform_1(%arg0: i32, %arg1: i32) -> (i32, i32, i32, i32) {
    %c1_i32 = arith.constant 1 : i32
    %0 = arith.addi %arg1, %c1_i32 : i32
    %c16_i32 = arith.constant 16 : i32
    %1 = arith.muli %0, %c16_i32 : i32
    %c15_i32 = arith.constant 15 : i32
    %2 = arith.minsi %1, %c15_i32 : i32
    %c0_i32 = arith.constant 0 : i32
    %c0_i32_0 = arith.constant 0 : i32
    %c0_i32_1 = arith.constant 0 : i32
    return %arg0, %2, %c0_i32, %c0_i32_0 : i32, i32, i32, i32
  }
  func.func @transform_2(%arg0: i32, %arg1: i32) -> (i32, i32) {
    %c0_i32 = arith.constant 0 : i32
    %c0_i32_0 = arith.constant 0 : i32
    %c0_i32_1 = arith.constant 0 : i32
    return %c0_i32, %c0_i32_0 : i32, i32
  }
  func.func @transform_3(%arg0: i32, %arg1: i32) -> (i32, i32) {
    %c0_i32 = arith.constant 0 : i32
    %c0_i32_0 = arith.constant 0 : i32
    %c0_i32_1 = arith.constant 0 : i32
    return %c0_i32, %c0_i32_0 : i32, i32
  }
  func.func @transform_4(%arg0: i32, %arg1: i32) -> (i32, i32) {
    %c0_i32 = arith.constant 0 : i32
    %c0_i32_0 = arith.constant 0 : i32
    %c0_i32_1 = arith.constant 0 : i32
    return %c0_i32, %c0_i32_0 : i32, i32
  }
  func.func @transform_5(%arg0: i32, %arg1: i32) -> (i32, i32) {
    %c0_i32 = arith.constant 0 : i32
    %c0_i32_0 = arith.constant 0 : i32
    %c0_i32_1 = arith.constant 0 : i32
    return %c0_i32, %c0_i32_0 : i32, i32
  }
  func.func @transform_6(%arg0: i32, %arg1: i32) -> (i32, i32) {
    %c0_i32 = arith.constant 0 : i32
    %c0_i32_0 = arith.constant 0 : i32
    %c0_i32_1 = arith.constant 0 : i32
    return %c0_i32, %c0_i32_0 : i32, i32
  }
  func.func @transform_7(%arg0: i32, %arg1: i32) -> (i32, i32) {
    %c0_i32 = arith.constant 0 : i32
    %c0_i32_0 = arith.constant 0 : i32
    %c0_i32_1 = arith.constant 0 : i32
    return %c0_i32, %c0_i32_0 : i32, i32
  }
  func.func @transform_8(%arg0: i32, %arg1: i32) -> (i32, i32, i32, i32) {
    %c0_i32 = arith.constant 0 : i32
    %c0_i32_0 = arith.constant 0 : i32
    %c0_i32_1 = arith.constant 0 : i32
    return %arg0, %arg1, %c0_i32, %c0_i32_0 : i32, i32, i32, i32
  }
}

</mosaic_0001>

<llo_original>
// kernel: tile.8
$region0: #{tile.8}
  #allocation0 [shape = 's32[1]{0}', space=sflag, size = 0x4, scoped, tag = 'scoped memory for tile.8']
  %s0 = inlined_call_operand.vmem [shape: f32[4], index: 0, kind: input, shape index: {}]
  %s1 = inlined_call_operand.vmem [shape: f32[4,4], index: 1, kind: output, shape index: {}]
  // Predicated region
  $region2: #{tile.8} parent=0 // pred_check
    _
  $region3: #{tile.8} parent=0 // pred_check_branch
    %3 = sbr.rel (0) target = $region5
  $region4: #{tile.8} parent=0 // pred_region
    _
  $region5: #{tile.8} parent=0 // pred_fallthru
    _
  %v4 = vld [vmem:[%s0] ss:$0 sm:$0xff]
  %5 = vst [vmem:[%s1] sm:$0xf] %v4

// kernel: tile.9
$region0: #{tile.9}
  %s0 = inlined_call_operand.vmem [shape: f32[4,4], index: 0, kind: input, shape index: {}]
  %s1 = inlined_call_operand.vmem [shape: f32[1,16], index: 1, kind: output, shape index: {}]
  $region1: #{tile.9} parent=0
    #allocation0 [shape = 'u8[4096]{0}', space=vmem, size = 0x1000, scoped, tag = 'scoped mem for output reshape']
    #allocation1 [shape = 'u8[4096]{0}', space=vmem, size = 0x1000, scoped, tag = 'scoped mem for input reshape']
    %s3 = sshllo.u32 0, 4
    %v4 = vld [vmem:[%s0] sm:%s3]
    %5 = vst [vmem:[#allocation1] sm:%s3] %v4
    %v6 = vld [vmem:[#allocation1] sm:$0x1]
    %vm7 = vcmask 31744
    %8 = vst.msk [vmem:[#allocation0] sm:$0x1] %vm7, %v6
    %s9 = scalar_lea.vmem [#allocation1], 3
    %v10 = vld [vmem:[%s9] sm:$0x1]
    %11 = vrot.lane.b32.xlu0 %v10, 12
    %v12 = vpop.permute.xlu0 %11
    %vm13 = vcmask 130144
    %14 = vst.msk [vmem:[#allocation0] sm:$0x1] %vm13, %v12
    %s15 = scalar_lea.vmem [#allocation1], 2
    %v16 = vld [vmem:[%s15] sm:$0x1]
    %17 = vrot.lane.b32.xlu0 %v16, 8
    %v18 = vpop.permute.xlu0 %17
    %vm19 = vcmask 97344
    %20 = vst.msk [vmem:[#allocation0] sm:$0x1] %vm19, %v18
    %s21 = scalar_lea.vmem [#allocation1], 1
    %v22 = vld [vmem:[%s21] sm:$0x1]
    %23 = vrot.lane.b32.xlu0 %v22, 4
    %v24 = vpop.permute.xlu0 %23
    %vm25 = vcmask 64544
    %26 = vst.msk [vmem:[#allocation0] sm:$0x1] %vm25, %v24
    %s28 = sshllo.u32 0, 1
    %v30 = vld [vmem:[#allocation0] sm:%s28]
    %s31 = sshllo.u32 0, 1
    %32 = vst [vmem:[%s1] sm:%s31] %v30

// kernel: decoder_block_forward.1
$region0: #{decoder_block_forward.1}
  #allocation0 [shape = 'u32[]', space=smem, size = 0x4, offset = 0x4, fixed_abs, tag = 'smem constant byte address 0x4 - core index']
  #allocation1 [shape = 'u32[144,128]{1,0:T(1,128)}', space=vmem, size = 0x12000, scoped, tag = 'internal scratch']
  %s0 = inlined_call_operand.vmem [shape: bf16[2,16,16,16], index: 0, kind: input, shape index: {}, may-alias: {0,1}]
  %s1 = inlined_call_operand.vmem [shape: bf16[2,16,16,16], index: 1, kind: input, shape index: {}, may-alias: {0,1}]
  %s2 = inlined_call_operand.vmem [shape: bf16[16,4], index: 2, kind: input, shape index: {}]
  %s3 = inlined_call_operand.vmem [shape: f32[1,4], index: 3, kind: input, shape index: {}]
  %s4 = inlined_call_operand.vmem [shape: bf16[16,16], index: 4, kind: input, shape index: {}]
  %s5 = inlined_call_operand.vmem [shape: f32[1,16], index: 5, kind: input, shape index: {}]
  %s6 = inlined_call_operand.vmem [shape: bf16[4,8], index: 6, kind: input, shape index: {}]
  %s7 = inlined_call_operand.vmem [shape: f32[1,8], index: 7, kind: input, shape index: {}]
  %s8 = inlined_call_operand.vmem [shape: bf16[2,32,16,16], index: 8, kind: output, shape index: {}]
  %s9 = sld [smem:[#allocation0]]
  $region65: #{decoder_block_forward.1} parent=0
    _
  %s11 = ssub.s32 1, %s9
  %s12 = scalar_select 0, %s11, %s9
  loop: start=0, step=1, limit=4
  $region2: #{decoder_block_forward.1} parent=0 // loop_pre_header
    _
  $region3: #{decoder_block_forward.1} parent=0 // loop_header
    %s14 = sphi 0, %s18
    %p15 = scmp.ge.s32.totalorder %s14, 4
    %s21 = sphi 0, %s33
    %s22 = sphi 0, %s29
    %s23 = sphi 0, %s21
    %s24 = sphi 0, %s22
    %s25 = sphi 0, %s23
    %s26 = sphi 0, %s24
    %s38 = sphi 0, %s40
    %s41 = sphi 0, %s38
    %s42 = sphi 0, %s41
    %s58 = sphi 0, %s42
    %s74 = sphi 0, %s76
    %s77 = sphi 0, %s74
    %s78 = sphi 0, %s77
    %s94 = sphi 0, %s78
    %s98 = sphi 0, %s98
    %s100 = sphi 0, %s98
    %s101 = sphi 0, %s100
    %s115 = sphi 0, %s101
    %s119 = sphi 0, %s119
    %s121 = sphi 0, %s119
    %s122 = sphi 0, %s121
    %s136 = sphi 0, %s122
    %s140 = sphi 0, %s140
    %s142 = sphi 0, %s140
    %s143 = sphi 0, %s142
    %s157 = sphi 0, %s143
    %s161 = sphi 0, %s161
    %s163 = sphi 0, %s161
    %s164 = sphi 0, %s163
    %s178 = sphi 0, %s164
    %s182 = sphi 0, %s182
    %s184 = sphi 0, %s182
    %s185 = sphi 0, %s184
    %s199 = sphi 0, %s185
    %s203 = sphi 0, %s203
    %s205 = sphi 0, %s203
    %s206 = sphi 0, %s205
    %s220 = sphi 0, %s206
    %s228 = sphi 0, %s230
    %s231 = sphi 0, %s228
    %s232 = sphi 0, %s231
    %s248 = sphi 0, %s232
  $region4: #{decoder_block_forward.1} parent=0 // loop_header_branch
    %17 = sbr.rel (%p15) target = $region8
  $region5: #{decoder_block_forward.1} parent=0 // loop_body
    %s19 = ssub.s32 %s14, 1
    %s20 = ssub.s32 %s14, 2
    %s27 = sadd.s32 1, %s22
    %p28 = scmp.ge.s32.totalorder %s27, 1
    %s29 = scalar_select %p28, 0, %s27
    %s30 = sadd.s32 1, %s21
    %s31 = scalar_select %p28, %s30, %s21
    %p32 = scmp.ge.s32.totalorder %s31, 2
    %s33 = scalar_select %p32, 0, %s31
    %s34 = ssub.s32 %s21, %s33
    %s35 = ssub.s32 %s22, %s29
    %s36 = sor.u32 %s34, %s35
    %p37 = scmp.eq.s32.totalorder %s36, 0
    %s39 = sadd.s32 %s38, 1
    %s40 = scalar_select %p37, %s38, %s39
    %p43 = pneg %p37
    %p44 = scmp.eq.s32.totalorder %s14, 1
    %p45 = por %p43, %p44
    %p46 = scmp.ne.s32.totalorder %s38, %s41
    %p47 = scmp.eq.s32.totalorder %s14, 0
    %p48 = por %p46, %p47
    %p49 = scmp.ne.s32.totalorder %s38, %s41
    %p50 = scmp.eq.s32.totalorder %s19, 1
    %p51 = por %p49, %p50
    %p52 = scmp.ne.s32.totalorder %s41, %s42
    %p53 = scmp.eq.s32.totalorder %s19, 0
    %p54 = por %p52, %p53
    %p55 = scmp.ne.s32.totalorder %s41, %s42
    %p56 = scmp.eq.s32.totalorder %s20, 1
    %p57 = por %p55, %p56
    %p59 = scmp.ne.s32.totalorder %s42, %s58
    %p60 = scmp.eq.s32.totalorder %s20, 0
    %p61 = por %p59, %p60
    %s62 = sadd.s32 %s22, 1
    %s63 = smul.u32 %s62, 16
    %p64 = scmp.lt.s32.totalorder %s63, 15
    %s65 = scalar_select %p64, %s63, 15
    %s66 = sadd.s32 %s29, 1
    %s67 = smul.u32 %s66, 16
    %p68 = scmp.lt.s32.totalorder %s67, 15
    %s69 = scalar_select %p68, %s67, 15
    %s70 = ssub.s32 %s21, %s33
    %s71 = ssub.s32 %s65, %s69
    %s72 = sor.u32 %s70, %s71
    %p73 = scmp.eq.s32.totalorder %s72, 0
    %s75 = sadd.s32 %s74, 1
    %s76 = scalar_select %p73, %s74, %s75
    %p79 = pneg %p73
    %p80 = scmp.eq.s32.totalorder %s14, 1
    %p81 = por %p79, %p80
    %p82 = scmp.ne.s32.totalorder %s74, %s77
    %p83 = scmp.eq.s32.totalorder %s14, 0
    %p84 = por %p82, %p83
    %p85 = scmp.ne.s32.totalorder %s74, %s77
    %p86 = scmp.eq.s32.totalorder %s19, 1
    %p87 = por %p85, %p86
    %p88 = scmp.ne.s32.totalorder %s77, %s78
    %p89 = scmp.eq.s32.totalorder %s19, 0
    %p90 = por %p88, %p89
    %p91 = scmp.ne.s32.totalorder %s77, %s78
    %p92 = scmp.eq.s32.totalorder %s20, 1
    %p93 = por %p91, %p92
    %p95 = scmp.ne.s32.totalorder %s78, %s94
    %p96 = scmp.eq.s32.totalorder %s20, 0
    %p97 = por %p95, %p96
    %s99 = sadd.s32 %s98, 1
    %p102 = scmp.eq.s32.totalorder %s14, 1
    %p103 = scmp.ne.s32.totalorder %s98, %s100
    %p104 = scmp.eq.s32.totalorder %s14, 0
    %p105 = por %p103, %p104
    %p106 = scmp.ne.s32.totalorder %s98, %s100
    %p107 = scmp.eq.s32.totalorder %s19, 1
    %p108 = por %p106, %p107
    %p109 = scmp.ne.s32.totalorder %s100, %s101
    %p110 = scmp.eq.s32.totalorder %s19, 0
    %p111 = por %p109, %p110
    %p112 = scmp.ne.s32.totalorder %s100, %s101
    %p113 = scmp.eq.s32.totalorder %s20, 1
    %p114 = por %p112, %p113
    %p116 = scmp.ne.s32.totalorder %s101, %s115
    %p117 = scmp.eq.s32.totalorder %s20, 0
    %p118 = por %p116, %p117
    %s120 = sadd.s32 %s119, 1
    %p123 = scmp.eq.s32.totalorder %s14, 1
    %p124 = scmp.ne.s32.totalorder %s119, %s121
    %p125 = scmp.eq.s32.totalorder %s14, 0
    %p126 = por %p124, %p125
    %p127 = scmp.ne.s32.totalorder %s119, %s121
    %p128 = scmp.eq.s32.totalorder %s19, 1
    %p129 = por %p127, %p128
    %p130 = scmp.ne.s32.totalorder %s121, %s122
    %p131 = scmp.eq.s32.totalorder %s19, 0
    %p132 = por %p130, %p131
    %p133 = scmp.ne.s32.totalorder %s121, %s122
    %p134 = scmp.eq.s32.totalorder %s20, 1
    %p135 = por %p133, %p134
    %p137 = scmp.ne.s32.totalorder %s122, %s136
    %p138 = scmp.eq.s32.totalorder %s20, 0
    %p139 = por %p137, %p138
    %s141 = sadd.s32 %s140, 1
    %p144 = scmp.eq.s32.totalorder %s14, 1
    %p145 = scmp.ne.s32.totalorder %s140, %s142
    %p146 = scmp.eq.s32.totalorder %s14, 0
    %p147 = por %p145, %p146
    %p148 = scmp.ne.s32.totalorder %s140, %s142
    %p149 = scmp.eq.s32.totalorder %s19, 1
    %p150 = por %p148, %p149
    %p151 = scmp.ne.s32.totalorder %s142, %s143
    %p152 = scmp.eq.s32.totalorder %s19, 0
    %p153 = por %p151, %p152
    %p154 = scmp.ne.s32.totalorder %s142, %s143
    %p155 = scmp.eq.s32.totalorder %s20, 1
    %p156 = por %p154, %p155
    %p158 = scmp.ne.s32.totalorder %s143, %s157
    %p159 = scmp.eq.s32.totalorder %s20, 0
    %p160 = por %p158, %p159
    %s162 = sadd.s32 %s161, 1
    %p165 = scmp.eq.s32.totalorder %s14, 1
    %p166 = scmp.ne.s32.totalorder %s161, %s163
    %p167 = scmp.eq.s32.totalorder %s14, 0
    %p168 = por %p166, %p167
    %p169 = scmp.ne.s32.totalorder %s161, %s163
    %p170 = scmp.eq.s32.totalorder %s19, 1
    %p171 = por %p169, %p170
    %p172 = scmp.ne.s32.totalorder %s163, %s164
    %p173 = scmp.eq.s32.totalorder %s19, 0
    %p174 = por %p172, %p173
    %p175 = scmp.ne.s32.totalorder %s163, %s164
    %p176 = scmp.eq.s32.totalorder %s20, 1
    %p177 = por %p175, %p176
    %p179 = scmp.ne.s32.totalorder %s164, %s178
    %p180 = scmp.eq.s32.totalorder %s20, 0
    %p181 = por %p179, %p180
    %s183 = sadd.s32 %s182, 1
    %p186 = scmp.eq.s32.totalorder %s14, 1
    %p187 = scmp.ne.s32.totalorder %s182, %s184
    %p188 = scmp.eq.s32.totalorder %s14, 0
    %p189 = por %p187, %p188
    %p190 = scmp.ne.s32.totalorder %s182, %s184
    %p191 = scmp.eq.s32.totalorder %s19, 1
    %p192 = por %p190, %p191
    %p193 = scmp.ne.s32.totalorder %s184, %s185
    %p194 = scmp.eq.s32.totalorder %s19, 0
    %p195 = por %p193, %p194
    %p196 = scmp.ne.s32.totalorder %s184, %s185
    %p197 = scmp.eq.s32.totalorder %s20, 1
    %p198 = por %p196, %p197
    %p200 = scmp.ne.s32.totalorder %s185, %s199
    %p201 = scmp.eq.s32.totalorder %s20, 0
    %p202 = por %p200, %p201
    %s204 = sadd.s32 %s203, 1
    %p207 = scmp.eq.s32.totalorder %s14, 1
    %p208 = scmp.ne.s32.totalorder %s203, %s205
    %p209 = scmp.eq.s32.totalorder %s14, 0
    %p210 = por %p208, %p209
    %p211 = scmp.ne.s32.totalorder %s203, %s205
    %p212 = scmp.eq.s32.totalorder %s19, 1
    %p213 = por %p211, %p212
    %p214 = scmp.ne.s32.totalorder %s205, %s206
    %p215 = scmp.eq.s32.totalorder %s19, 0
    %p216 = por %p214, %p215
    %p217 = scmp.ne.s32.totalorder %s205, %s206
    %p218 = scmp.eq.s32.totalorder %s20, 1
    %p219 = por %p217, %p218
    %p221 = scmp.ne.s32.totalorder %s206, %s220
    %p222 = scmp.eq.s32.totalorder %s20, 0
    %p223 = por %p221, %p222
    %s224 = ssub.s32 %s21, %s33
    %s225 = ssub.s32 %s22, %s29
    %s226 = sor.u32 %s224, %s225
    %p227 = scmp.eq.s32.totalorder %s226, 0
    %s229 = sadd.s32 %s228, 1
    %s230 = scalar_select %p227, %s228, %s229
    %p233 = pneg %p227
    %p234 = scmp.eq.s32.totalorder %s14, 1
    %p235 = por %p233, %p234
    %p236 = scmp.ne.s32.totalorder %s228, %s231
    %p237 = scmp.eq.s32.totalorder %s14, 0
    %p238 = por %p236, %p237
    %p239 = scmp.ne.s32.totalorder %s228, %s231
    %p240 = scmp.eq.s32.totalorder %s19, 1
    %p241 = por %p239, %p240
    %p242 = scmp.ne.s32.totalorder %s231, %s232
    %p243 = scmp.eq.s32.totalorder %s19, 0
    %p244 = por %p242, %p243
    %p245 = scmp.ne.s32.totalorder %s231, %s232
    %p246 = scmp.eq.s32.totalorder %s20, 1
    %p247 = por %p245, %p246
    %p249 = scmp.ne.s32.totalorder %s232, %s248
    %p250 = scmp.eq.s32.totalorder %s20, 0
    %p251 = por %p249, %p250
    %p252 = scmp.le.s32.totalorder 1, %s14
    %p253 = scmp.lt.s32.totalorder %s14, 3
    %p254 = pnand %p252, %p253
    %p255 = pneg %p254
    // Predicated region
    $region9: #{decoder_block_forward.1} parent=5 // pred_check
      _
    $region10: #{decoder_block_forward.1} parent=5 // pred_check_branch
      %257 = sbr.rel (%p254) target = $region12
    $region11: #{decoder_block_forward.1} parent=5 // pred_region
      %s258 = ssub.s32 %s14, 1
      // Predicated region
      $region13: #{decoder_block_forward.1} parent=11 // pred_check
        %p259 = pneg %p111
      $region14: #{decoder_block_forward.1} parent=11 // pred_check_branch
        %261 = sbr.rel (%p259) target = $region16
      $region15: #{decoder_block_forward.1} parent=11 // pred_region
        _
      $region16: #{decoder_block_forward.1} parent=11 // pred_fallthru
        _
      // Predicated region
      $region17: #{decoder_block_forward.1} parent=11 // pred_check
        %p262 = pneg %p132
      $region18: #{decoder_block_forward.1} parent=11 // pred_check_branch
        %264 = sbr.rel (%p262) target = $region20
      $region19: #{decoder_block_forward.1} parent=11 // pred_region
        _
      $region20: #{decoder_block_forward.1} parent=11 // pred_fallthru
        _
      // Predicated region
      $region21: #{decoder_block_forward.1} parent=11 // pred_check
        %p265 = pneg %p153
      $region22: #{decoder_block_forward.1} parent=11 // pred_check_branch
        %267 = sbr.rel (%p265) target = $region24
      $region23: #{decoder_block_forward.1} parent=11 // pred_region
        _
      $region24: #{decoder_block_forward.1} parent=11 // pred_fallthru
        _
      // Predicated region
      $region25: #{decoder_block_forward.1} parent=11 // pred_check
        %p268 = pneg %p174
      $region26: #{decoder_block_forward.1} parent=11 // pred_check_branch
        %270 = sbr.rel (%p268) target = $region28
      $region27: #{decoder_block_forward.1} parent=11 // pred_region
        _
      $region28: #{decoder_block_forward.1} parent=11 // pred_fallthru
        _
      // Predicated region
      $region29: #{decoder_block_forward.1} parent=11 // pred_check
        %p271 = pneg %p195
      $region30: #{decoder_block_forward.1} parent=11 // pred_check_branch
        %273 = sbr.rel (%p271) target = $region32
      $region31: #{decoder_block_forward.1} parent=11 // pred_region
        _
      $region32: #{decoder_block_forward.1} parent=11 // pred_fallthru
        _
      // Predicated region
      $region33: #{decoder_block_forward.1} parent=11 // pred_check
        %p274 = pneg %p216
      $region34: #{decoder_block_forward.1} parent=11 // pred_check_branch
        %276 = sbr.rel (%p274) target = $region36
      $region35: #{decoder_block_forward.1} parent=11 // pred_region
        _
      $region36: #{decoder_block_forward.1} parent=11 // pred_fallthru
        _
    $region12: #{decoder_block_forward.1} parent=5 // pred_fallthru
      _
    %p277 = scmp.lt.s32.totalorder %s14, 2
    // Predicated region
    $region37: #{decoder_block_forward.1} parent=5 // pred_check
      %p278 = pneg %p277
    $region38: #{decoder_block_forward.1} parent=5 // pred_check_branch
      %280 = sbr.rel (%p278) target = $region40
    $region39: #{decoder_block_forward.1} parent=5 // pred_region
      // Predicated region
      $region41: #{decoder_block_forward.1} parent=39 // pred_check
        %p281 = pneg %p48
      $region42: #{decoder_block_forward.1} parent=39 // pred_check_branch
        %283 = sbr.rel (%p281) target = $region44
      $region43: #{decoder_block_forward.1} parent=39 // pred_region
        %s284 = smul.u32 16, %s22
        %p285 = scmp.lt.s32.totalorder %s21, 1
        %s286 = scalar_select %p285, %s21, 1
        %p287 = scmp.lt.s32.totalorder %s284, 15
        %s288 = scalar_select %p287, %s284, 15
        %s289 = smul.addr %s288, 2
        %s290 = smul.addr %s286, 32
        %s291 = sadd.s32 %s289, %s290
        %s292 = smul.addr %s291, 4
        %s293 = scalar_lea.vmem %s0, %s292
        %s294 = smul.u32 16, %s22
      $region44: #{decoder_block_forward.1} parent=39 // pred_fallthru
        _
      // Predicated region
      $region45: #{decoder_block_forward.1} parent=39 // pred_check
        %p295 = pneg %p84
      $region46: #{decoder_block_forward.1} parent=39 // pred_check_branch
        %297 = sbr.rel (%p295) target = $region48
      $region47: #{decoder_block_forward.1} parent=39 // pred_region
        %s298 = sadd.s32 %s22, 1
        %s299 = smul.u32 %s298, 16
        %p300 = scmp.lt.s32.totalorder %s299, 15
        %s301 = scalar_select %p300, %s299, 15
        %p302 = scmp.lt.s32.totalorder %s21, 1
        %s303 = scalar_select %p302, %s21, 1
        %p304 = scmp.lt.s32.totalorder %s301, 15
        %s305 = scalar_select %p304, %s301, 15
        %s306 = smul.addr %s305, 2
        %s307 = smul.addr %s303, 32
        %s308 = sadd.s32 %s306, %s307
        %s309 = smul.addr %s308, 4
        %s310 = scalar_lea.vmem %s1, %s309
        %s311 = sadd.s32 %s22, 1
        %s312 = smul.u32 %s311, 16
        %p313 = scmp.lt.s32.totalorder %s312, 15
        %s314 = scalar_select %p313, %s312, 15
      $region48: #{decoder_block_forward.1} parent=39 // pred_fallthru
        _
    $region40: #{decoder_block_forward.1} parent=5 // pred_fallthru
      _
    %p315 = scmp.le.s32.totalorder 1, %s14
    %p316 = scmp.lt.s32.totalorder %s14, 3
    %p317 = pnand %p315, %p316
    %p318 = pneg %p317
    // Predicated region
    $region49: #{decoder_block_forward.1} parent=5 // pred_check
      _
    $region50: #{decoder_block_forward.1} parent=5 // pred_check_branch
      %320 = sbr.rel (%p317) target = $region52
    $region51: #{decoder_block_forward.1} parent=5 // pred_region
      %s321 = ssub.s32 %s14, 1
      %s322 = smul.u32 16, %s24
      %p323 = scmp.lt.s32.totalorder %s23, 1
      %s324 = scalar_select %p323, %s23, 1
      %p325 = scmp.lt.s32.totalorder %s322, 15
      %s326 = scalar_select %p325, %s322, 15
      %s327 = smul.addr %s326, 2
      %s328 = smul.addr %s324, 32
      %s329 = sadd.s32 %s327, %s328
      %s330 = smul.addr %s329, 4
      %s331 = scalar_lea.vmem %s0, %s330
      %p332 = pneg %p54
      %p333 = pneg %p51
      %s334 = sadd.s32 %s24, 1
      %s335 = smul.u32 %s334, 16
      %p336 = scmp.lt.s32.totalorder %s335, 15
      %s337 = scalar_select %p336, %s335, 15
      %p338 = scmp.lt.s32.totalorder %s23, 1
      %s339 = scalar_select %p338, %s23, 1
      %p340 = scmp.lt.s32.totalorder %s337, 15
      %s341 = scalar_select %p340, %s337, 15
      %s342 = smul.addr %s341, 2
      %s343 = smul.addr %s339, 32
      %s344 = sadd.s32 %s342, %s343
      %s345 = smul.addr %s344, 4
      %s346 = scalar_lea.vmem %s1, %s345
      %p347 = pneg %p90
      %p348 = pneg %p87
      %p349 = pneg %p111
      %p350 = pneg %p108
      %p351 = pneg %p132
      %p352 = pneg %p129
      %p353 = pneg %p153
      %p354 = pneg %p150
      %p355 = pneg %p174
      %p356 = pneg %p171
      %p357 = pneg %p195
      %p358 = pneg %p192
      %p359 = pneg %p216
      %p360 = pneg %p213
      %p361 = pneg %p244
      %p362 = pneg %p241
      %s363 = smul.u32 32, %s24
      %p364 = scmp.lt.s32.totalorder %s23, 1
      %s365 = scalar_select %p364, %s23, 1
      %p366 = scmp.lt.s32.totalorder %s363, 31
      %s367 = scalar_select %p366, %s363, 31
      %s368 = smul.addr %s367, 2
      %s369 = smul.addr %s365, 64
      %s370 = sadd.s32 %s368, %s369
      %s371 = smul.addr %s370, 4
      %s372 = scalar_lea.vmem %s8, %s371
      %s373 = smul.u32 16, %s24
      %p374 = scmp.lt.s32.totalorder %s23, 1
      %s375 = scalar_select %p374, %s23, 1
      %p376 = scmp.lt.s32.totalorder %s373, 15
      %s377 = scalar_select %p376, %s373, 15
      %s378 = smul.addr %s377, 2
      %s379 = smul.addr %s375, 32
      %s380 = sadd.s32 %s378, %s379
      %s381 = smul.addr %s380, 4
      %s382 = scalar_lea.vmem %s0, %s381
      %s383 = smul.u32 16, %s24
      %s384 = sadd.s32 %s24, 1
      %s385 = smul.u32 %s384, 16
      %p386 = scmp.lt.s32.totalorder %s385, 15
      %s387 = scalar_select %p386, %s385, 15
      %p388 = scmp.lt.s32.totalorder %s23, 1
      %s389 = scalar_select %p388, %s23, 1
      %p390 = scmp.lt.s32.totalorder %s387, 15
      %s391 = scalar_select %p390, %s387, 15
      %s392 = smul.addr %s391, 2
      %s393 = smul.addr %s389, 32
      %s394 = sadd.s32 %s392, %s393
      %s395 = smul.addr %s394, 4
      %s396 = scalar_lea.vmem %s1, %s395
      %s397 = sadd.s32 %s24, 1
      %s398 = smul.u32 %s397, 16
      %p399 = scmp.lt.s32.totalorder %s398, 15
      %s400 = scalar_select %p399, %s398, 15
      %s401 = smul.u32 32, %s24
      %p402 = scmp.lt.s32.totalorder %s23, 1
      %s403 = scalar_select %p402, %s23, 1
      %p404 = scmp.lt.s32.totalorder %s401, 31
      %s405 = scalar_select %p404, %s401, 31
      %s406 = smul.addr %s405, 2
      %s407 = smul.addr %s403, 64
      %s408 = sadd.s32 %s406, %s407
      %s409 = smul.addr %s408, 4
      %s410 = scalar_lea.vmem %s8, %s409
      %s411 = smul.u32 32, %s24
      %v413 = vld [vmem:[%s382] sm:$0xf]
      %v414 = vld [vmem:[%s382 + $0x4] sm:$0xf]
      %v415 = vld [vmem:[%s382 + $0x8] sm:$0xf]
      %v416 = vld [vmem:[%s382 + $0xc] sm:$0xf]
      %v417 = vld [vmem:[%s382 + $0x10] sm:$0xf]
      %v418 = vld [vmem:[%s382 + $0x14] sm:$0xf]
      %v419 = vld [vmem:[%s382 + $0x18] sm:$0xf]
      %v420 = vld [vmem:[%s382 + $0x1c] sm:$0xf]
      %v421 = vld [vmem:[%s382 + $0x20] sm:$0xf]
      %v422 = vld [vmem:[%s382 + $0x24] sm:$0xf]
      %v423 = vld [vmem:[%s382 + $0x28] sm:$0xf]
      %v424 = vld [vmem:[%s382 + $0x2c] sm:$0xf]
      %v425 = vld [vmem:[%s382 + $0x30] sm:$0xf]
      %v426 = vld [vmem:[%s382 + $0x34] sm:$0xf]
      %v427 = vld [vmem:[%s382 + $0x38] sm:$0xf]
      %v428 = vld [vmem:[%s382 + $0x3c] sm:$0xf]
      %v429 = vld [vmem:[%s382 + $0x40] sm:$0xf]
      %v430 = vld [vmem:[%s382 + $0x44] sm:$0xf]
      %v431 = vld [vmem:[%s382 + $0x48] sm:$0xf]
      %v432 = vld [vmem:[%s382 + $0x4c] sm:$0xf]
      %v433 = vld [vmem:[%s382 + $0x50] sm:$0xf]
      %v434 = vld [vmem:[%s382 + $0x54] sm:$0xf]
      %v435 = vld [vmem:[%s382 + $0x58] sm:$0xf]
      %v436 = vld [vmem:[%s382 + $0x5c] sm:$0xf]
      %v437 = vld [vmem:[%s382 + $0x60] sm:$0xf]
      %v438 = vld [vmem:[%s382 + $0x64] sm:$0xf]
      %v439 = vld [vmem:[%s382 + $0x68] sm:$0xf]
      %v440 = vld [vmem:[%s382 + $0x6c] sm:$0xf]
      %v441 = vld [vmem:[%s382 + $0x70] sm:$0xf]
      %v442 = vld [vmem:[%s382 + $0x74] sm:$0xf]
      %v443 = vld [vmem:[%s382 + $0x78] sm:$0xf]
      %v444 = vld [vmem:[%s382 + $0x7c] sm:$0xf]
      %v445 = vld [vmem:[%s2] sm:$0xf]
      %v446 = vld [vmem:[%s2 + $0x4] sm:$0xf]
      %v447 = vld [vmem:[%s3] sm:$0x1]
      %v449 = vlaneseq
      %v450 = vshrl.u32 %v449, 7
      %v451 = vsub.s32 0, %v450
      %v452 = vrot.slane %v447, %v451
      %v486 = vunpack.c.l.b16 %v413
      %v487 = vunpack.c.l.b16 %v414
      %v488 = vunpack.c.l.b16 %v415
      %v489 = vunpack.c.l.b16 %v416
      %v490 = vunpack.c.l.b16 %v417
      %v491 = vunpack.c.l.b16 %v418
      %v492 = vunpack.c.l.b16 %v419
      %v493 = vunpack.c.l.b16 %v420
      %v494 = vunpack.c.l.b16 %v421
      %v495 = vunpack.c.l.b16 %v422
      %v496 = vunpack.c.l.b16 %v423
      %v497 = vunpack.c.l.b16 %v424
      %v498 = vunpack.c.l.b16 %v425
      %v499 = vunpack.c.l.b16 %v426
      %v500 = vunpack.c.l.b16 %v427
      %v501 = vunpack.c.l.b16 %v428
      %v502 = vunpack.c.l.b16 %v429
      %v503 = vunpack.c.l.b16 %v430
      %v504 = vunpack.c.l.b16 %v431
      %v505 = vunpack.c.l.b16 %v432
      %v506 = vunpack.c.l.b16 %v433
      %v507 = vunpack.c.l.b16 %v434
      %v508 = vunpack.c.l.b16 %v435
      %v509 = vunpack.c.l.b16 %v436
      %v510 = vunpack.c.l.b16 %v437
      %v511 = vunpack.c.l.b16 %v438
      %v512 = vunpack.c.l.b16 %v439
      %v513 = vunpack.c.l.b16 %v440
      %v514 = vunpack.c.l.b16 %v441
      %v515 = vunpack.c.l.b16 %v442
      %v516 = vunpack.c.l.b16 %v443
      %v517 = vunpack.c.l.b16 %v444
      %v518 = vpack.c.b16 %v487, %v486
      %v519 = vpack.c.b16 %v489, %v488
      %v520 = vpack.c.b16 %v491, %v490
      %v521 = vpack.c.b16 %v493, %v492
      %v522 = vpack.c.b16 %v495, %v494
      %v523 = vpack.c.b16 %v497, %v496
      %v524 = vpack.c.b16 %v499, %v498
      %v525 = vpack.c.b16 %v501, %v500
      %v526 = vpack.c.b16 %v503, %v502
      %v527 = vpack.c.b16 %v505, %v504
      %v528 = vpack.c.b16 %v507, %v506
      %v529 = vpack.c.b16 %v509, %v508
      %v530 = vpack.c.b16 %v511, %v510
      %v531 = vpack.c.b16 %v513, %v512
      %v532 = vpack.c.b16 %v515, %v514
      %v533 = vpack.c.b16 %v517, %v516
      %v536 = vunpack.c.l.b16 %v445
      %v537 = vunpack.c.l.b16 %v446
      %v538 = vpack.c.b16 %v537, %v536
      %vm540 = vcmask 130048
      %v542 = vsel %vm540, %v518, 0
      %v545 = vsel %vm540, %v519, 0
      %v548 = vsel %vm540, %v520, 0
      %v551 = vsel %vm540, %v521, 0
      %v554 = vsel %vm540, %v522, 0
      %v557 = vsel %vm540, %v523, 0
      %v560 = vsel %vm540, %v524, 0
      %v563 = vsel %vm540, %v525, 0
      %v566 = vsel %vm540, %v526, 0
      %v569 = vsel %vm540, %v527, 0
      %v572 = vsel %vm540, %v528, 0
      %v575 = vsel %vm540, %v529, 0
      %v578 = vsel %vm540, %v530, 0
      %v581 = vsel %vm540, %v531, 0
      %v584 = vsel %vm540, %v532, 0
      %v587 = vsel %vm540, %v533, 0
      %589 = vmatprep.subr.bf16.mxu0 0
      %590 = vmatpush1.bf16.msra.mxu0 %v538
      %591 = vmatprep.subr.bf16.mxu0 0
      %592 = vmatpush1.bf16.msra.mxu0 0
      %593 = vmatprep.subr.bf16.mxu0 0
      %594 = vmatpush1.bf16.msra.mxu0 0
      %595 = vmatprep.subr.bf16.mxu0 0
      %596 = vmatpush1.bf16.msra.mxu0 0
      %597 = vmatprep.subr.bf16.mxu0 0
      %598 = vmatpush1.bf16.msra.mxu0 0
      %599 = vmatprep.subr.bf16.mxu0 0
      %600 = vmatpush1.bf16.msra.mxu0 0
      %601 = vmatprep.subr.bf16.mxu0 0
      %602 = vmatpush1.bf16.msra.mxu0 0
      %603 = vmatprep.subr.bf16.mxu0 0
      %604 = vmatpush1.bf16.msra.mxu0 0
      %605 = vmatprep.subr.bf16.mxu0 0
      %606 = vmatpush1.bf16.msra.mxu0 0
      %607 = vmatprep.subr.bf16.mxu0 0
      %608 = vmatpush1.bf16.msra.mxu0 0
      %609 = vmatprep.subr.bf16.mxu0 0
      %610 = vmatpush1.bf16.msra.mxu0 0
      %611 = vmatprep.subr.bf16.mxu0 0
      %612 = vmatpush1.bf16.msra.mxu0 0
      %613 = vmatprep.subr.bf16.mxu0 0
      %614 = vmatpush1.bf16.msra.mxu0 0
      %615 = vmatprep.subr.bf16.mxu0 0
      %616 = vmatpush1.bf16.msra.mxu0 0
      %617 = vmatprep.subr.bf16.mxu0 0
      %618 = vmatpush1.bf16.msra.mxu0 0
      %619 = vmatprep.subr.bf16.mxu0 0
      %620 = vmatpush1.bf16.msra.mxu0 0
      %621 = vmatprep.mubr.bf16.mxu0 0
      %622 = vmatmul.mubr.bf16.gmra.mrb[0].mxu0 %v542
      %v623 = vpop.f32.mrb[0].mxu0
      %v624 = vadd.f32 %v452, %v623
      %v625 = vpop.f32.mrb[0].mxu0
      %v626 = vpop.f32.mrb[0].mxu0
      %v627 = vadd.f32 %v452, %v626
      %v628 = vpop.f32.mrb[0].mxu0
      %629 = vmatprep.mubr.bf16.mxu0 0
      %630 = vmatmul.mubr.bf16.gmra.mrb[0].mxu0 %v545
      %v631 = vpop.f32.mrb[0].mxu0
      %v632 = vadd.f32 %v452, %v631
      %v633 = vpop.f32.mrb[0].mxu0
      %v634 = vpop.f32.mrb[0].mxu0
      %v635 = vadd.f32 %v452, %v634
      %v636 = vpop.f32.mrb[0].mxu0
      %637 = vmatprep.mubr.bf16.mxu0 0
      %638 = vmatmul.mubr.bf16.gmra.mrb[0].mxu0 %v548
      %v639 = vpop.f32.mrb[0].mxu0
      %v640 = vadd.f32 %v452, %v639
      %v641 = vpop.f32.mrb[0].mxu0
      %v642 = vpop.f32.mrb[0].mxu0
      %v643 = vadd.f32 %v452, %v642
      %v644 = vpop.f32.mrb[0].mxu0
      %645 = vmatprep.mubr.bf16.mxu0 0
      %646 = vmatmul.mubr.bf16.gmra.mrb[0].mxu0 %v551
      %v647 = vpop.f32.mrb[0].mxu0
      %v648 = vadd.f32 %v452, %v647
      %v649 = vpop.f32.mrb[0].mxu0
      %v650 = vpop.f32.mrb[0].mxu0
      %v651 = vadd.f32 %v452, %v650
      %v652 = vpop.f32.mrb[0].mxu0
      %653 = vmatprep.mubr.bf16.mxu0 0
      %654 = vmatmul.mubr.bf16.gmra.mrb[0].mxu0 %v554
      %v655 = vpop.f32.mrb[0].mxu0
      %v656 = vadd.f32 %v452, %v655
      %v657 = vpop.f32.mrb[0].mxu0
      %v658 = vpop.f32.mrb[0].mxu0
      %v659 = vadd.f32 %v452, %v658
      %v660 = vpop.f32.mrb[0].mxu0
      %661 = vmatprep.mubr.bf16.mxu0 0
      %662 = vmatmul.mubr.bf16.gmra.mrb[0].mxu0 %v557
      %v663 = vpop.f32.mrb[0].mxu0
      %v664 = vadd.f32 %v452, %v663
      %v665 = vpop.f32.mrb[0].mxu0
      %v666 = vpop.f32.mrb[0].mxu0
      %v667 = vadd.f32 %v452, %v666
      %v668 = vpop.f32.mrb[0].mxu0
      %669 = vmatprep.mubr.bf16.mxu0 0
      %670 = vmatmul.mubr.bf16.gmra.mrb[0].mxu0 %v560
      %v671 = vpop.f32.mrb[0].mxu0
      %v672 = vadd.f32 %v452, %v671
      %v673 = vpop.f32.mrb[0].mxu0
      %v674 = vpop.f32.mrb[0].mxu0
      %v675 = vadd.f32 %v452, %v674
      %v676 = vpop.f32.mrb[0].mxu0
      %677 = vmatprep.mubr.bf16.mxu0 0
      %678 = vmatmul.mubr.bf16.gmra.mrb[0].mxu0 %v563
      %v679 = vpop.f32.mrb[0].mxu0
      %v680 = vadd.f32 %v452, %v679
      %v681 = vpop.f32.mrb[0].mxu0
      %v682 = vpop.f32.mrb[0].mxu0
      %v683 = vadd.f32 %v452, %v682
      %v684 = vpop.f32.mrb[0].mxu0
      %685 = vmatprep.mubr.bf16.mxu0 0
      %686 = vmatmul.mubr.bf16.gmra.mrb[0].mxu0 %v566
      %v687 = vpop.f32.mrb[0].mxu0
      %v688 = vadd.f32 %v452, %v687
      %v689 = vpop.f32.mrb[0].mxu0
      %v690 = vpop.f32.mrb[0].mxu0
      %v691 = vadd.f32 %v452, %v690
      %v692 = vpop.f32.mrb[0].mxu0
      %693 = vmatprep.mubr.bf16.mxu0 0
      %694 = vmatmul.mubr.bf16.gmra.mrb[0].mxu0 %v569
      %v695 = vpop.f32.mrb[0].mxu0
      %v696 = vadd.f32 %v452, %v695
      %v697 = vpop.f32.mrb[0].mxu0
      %v698 = vpop.f32.mrb[0].mxu0
      %v699 = vadd.f32 %v452, %v698
      %v700 = vpop.f32.mrb[0].mxu0
      %701 = vmatprep.mubr.bf16.mxu0 0
      %702 = vmatmul.mubr.bf16.gmra.mrb[0].mxu0 %v572
      %v703 = vpop.f32.mrb[0].mxu0
      %v704 = vadd.f32 %v452, %v703
      %v705 = vpop.f32.mrb[0].mxu0
      %v706 = vpop.f32.mrb[0].mxu0
      %v707 = vadd.f32 %v452, %v706
      %v708 = vpop.f32.mrb[0].mxu0
      %709 = vmatprep.mubr.bf16.mxu0 0
      %710 = vmatmul.mubr.bf16.gmra.mrb[0].mxu0 %v575
      %v711 = vpop.f32.mrb[0].mxu0
      %v712 = vadd.f32 %v452, %v711
      %v713 = vpop.f32.mrb[0].mxu0
      %v714 = vpop.f32.mrb[0].mxu0
      %v715 = vadd.f32 %v452, %v714
      %v716 = vpop.f32.mrb[0].mxu0
      %717 = vmatprep.mubr.bf16.mxu0 0
      %718 = vmatmul.mubr.bf16.gmra.mrb[0].mxu0 %v578
      %v719 = vpop.f32.mrb[0].mxu0
      %v720 = vadd.f32 %v452, %v719
      %v721 = vpop.f32.mrb[0].mxu0
      %v722 = vpop.f32.mrb[0].mxu0
      %v723 = vadd.f32 %v452, %v722
      %v724 = vpop.f32.mrb[0].mxu0
      %725 = vmatprep.mubr.bf16.mxu0 0
      %726 = vmatmul.mubr.bf16.gmra.mrb[0].mxu0 %v581
      %v727 = vpop.f32.mrb[0].mxu0
      %v728 = vadd.f32 %v452, %v727
      %v729 = vpop.f32.mrb[0].mxu0
      %v730 = vpop.f32.mrb[0].mxu0
      %v731 = vadd.f32 %v452, %v730
      %v732 = vpop.f32.mrb[0].mxu0
      %733 = vmatprep.mubr.bf16.mxu0 0
      %734 = vmatmul.mubr.bf16.gmra.mrb[0].mxu0 %v584
      %v735 = vpop.f32.mrb[0].mxu0
      %v736 = vadd.f32 %v452, %v735
      %v737 = vpop.f32.mrb[0].mxu0
      %v738 = vpop.f32.mrb[0].mxu0
      %v739 = vadd.f32 %v452, %v738
      %v740 = vpop.f32.mrb[0].mxu0
      %741 = vmatprep.mubr.bf16.mxu0 0
      %742 = vmatmul.mubr.bf16.gmra.mrb[0].mxu0 %v587
      %v743 = vpop.f32.mrb[0].mxu0
      %v744 = vadd.f32 %v452, %v743
      %v745 = vpop.f32.mrb[0].mxu0
      %v746 = vpop.f32.mrb[0].mxu0
      %v747 = vadd.f32 %v452, %v746
      %v748 = vpop.f32.mrb[0].mxu0
      %749 = vdwg.mxu0
      %v750 = vmax.f32 %v624, 0.0
      %v751 = vmax.f32 %v627, 0.0
      %v752 = vmax.f32 %v632, 0.0
      %v753 = vmax.f32 %v635, 0.0
      %v754 = vmax.f32 %v640, 0.0
      %v755 = vmax.f32 %v643, 0.0
      %v756 = vmax.f32 %v648, 0.0
      %v757 = vmax.f32 %v651, 0.0
      %v758 = vmax.f32 %v656, 0.0
      %v759 = vmax.f32 %v659, 0.0
      %v760 = vmax.f32 %v664, 0.0
      %v761 = vmax.f32 %v667, 0.0
      %v762 = vmax.f32 %v672, 0.0
      %v763 = vmax.f32 %v675, 0.0
      %v764 = vmax.f32 %v680, 0.0
      %v765 = vmax.f32 %v683, 0.0
      %v766 = vmax.f32 %v688, 0.0
      %v767 = vmax.f32 %v691, 0.0
      %v768 = vmax.f32 %v696, 0.0
      %v769 = vmax.f32 %v699, 0.0
      %v770 = vmax.f32 %v704, 0.0
      %v771 = vmax.f32 %v707, 0.0
      %v772 = vmax.f32 %v712, 0.0
      %v773 = vmax.f32 %v715, 0.0
      %v774 = vmax.f32 %v720, 0.0
      %v775 = vmax.f32 %v723, 0.0
      %v776 = vmax.f32 %v728, 0.0
      %v777 = vmax.f32 %v731, 0.0
      %v778 = vmax.f32 %v736, 0.0
      %v779 = vmax.f32 %v739, 0.0
      %v780 = vmax.f32 %v744, 0.0
      %v781 = vmax.f32 %v747, 0.0
      %v782 = vpack.c.bf16 %v751, %v750
      %v783 = vpack.c.bf16 %v753, %v752
      %v784 = vpack.c.bf16 %v755, %v754
      %v785 = vpack.c.bf16 %v757, %v756
      %v786 = vpack.c.bf16 %v759, %v758
      %v787 = vpack.c.bf16 %v761, %v760
      %v788 = vpack.c.bf16 %v763, %v762
      %v789 = vpack.c.bf16 %v765, %v764
      %v790 = vpack.c.bf16 %v767, %v766
      %v791 = vpack.c.bf16 %v769, %v768
      %v792 = vpack.c.bf16 %v771, %v770
      %v793 = vpack.c.bf16 %v773, %v772
      %v794 = vpack.c.bf16 %v775, %v774
      %v795 = vpack.c.bf16 %v777, %v776
      %v796 = vpack.c.bf16 %v779, %v778
      %v797 = vpack.c.bf16 %v781, %v780
      %v798 = vld [vmem:[%s396] sm:$0xf]
      %v799 = vld [vmem:[%s396 + $0x4] sm:$0xf]
      %v802 = vunpack.c.l.b16 %v798
      %v803 = vunpack.c.l.b16 %v799
      %v804 = vpack.c.b16 %v803, %v802
      %v806 = vsel %vm540, %v804, 0
      %808 = vmatprep.subr.bf16.mxu0 0
      %809 = vmatpush1.bf16.msra.mxu0 %v538
      %810 = vmatprep.subr.bf16.mxu0 0
      %811 = vmatpush1.bf16.msra.mxu0 0
      %812 = vmatprep.subr.bf16.mxu0 0
      %813 = vmatpush1.bf16.msra.mxu0 0
      %814 = vmatprep.subr.bf16.mxu0 0
      %815 = vmatpush1.bf16.msra.mxu0 0
      %816 = vmatprep.subr.bf16.mxu0 0
      %817 = vmatpush1.bf16.msra.mxu0 0
      %818 = vmatprep.subr.bf16.mxu0 0
      %819 = vmatpush1.bf16.msra.mxu0 0
      %820 = vmatprep.subr.bf16.mxu0 0
      %821 = vmatpush1.bf16.msra.mxu0 0
      %822 = vmatprep.subr.bf16.mxu0 0
      %823 = vmatpush1.bf16.msra.mxu0 0
      %824 = vmatprep.subr.bf16.mxu0 0
      %825 = vmatpush1.bf16.msra.mxu0 0
      %826 = vmatprep.subr.bf16.mxu0 0
      %827 = vmatpush1.bf16.msra.mxu0 0
      %828 = vmatprep.subr.bf16.mxu0 0
      %829 = vmatpush1.bf16.msra.mxu0 0
      %830 = vmatprep.subr.bf16.mxu0 0
      %831 = vmatpush1.bf16.msra.mxu0 0
      %832 = vmatprep.subr.bf16.mxu0 0
      %833 = vmatpush1.bf16.msra.mxu0 0
      %834 = vmatprep.subr.bf16.mxu0 0
      %835 = vmatpush1.bf16.msra.mxu0 0
      %836 = vmatprep.subr.bf16.mxu0 0
      %837 = vmatpush1.bf16.msra.mxu0 0
      %838 = vmatprep.subr.bf16.mxu0 0
      %839 = vmatpush1.bf16.msra.mxu0 0
      %840 = vmatprep.mubr.bf16.mxu0 0
      %841 = vmatmul.mubr.bf16.gmra.mrb[0].mxu0 %v806
      %v842 = vpop.f32.mrb[0].mxu0
      %v843 = vadd.f32 %v452, %v842
      %v844 = vpop.f32.mrb[0].mxu0
      %v845 = vpop.f32.mrb[0].mxu0
      %v846 = vadd.f32 %v452, %v845
      %v847 = vpop.f32.mrb[0].mxu0
      %848 = vdwg.mxu0
      %v849 = vmax.f32 %v843, 0.0
      %v850 = vmax.f32 %v846, 0.0
      %s851 = sadd.s32 %s24, 1
      %p852 = scmp.lt.s32.totalorder %s851, 1
      %s853 = scalar_select %p852, 1, 0
      %v854 = vstv %s853
      %vm855 = vcmp.eq.s32.totalorder %v854, 1
      %v856 = vsel %vm855, %v849, 0.0
      %v857 = vsel %vm855, %v850, 0.0
      %v858 = vpack.c.bf16 %v857, %v856
      %v860 = vshrl.u32 %v782, 16
      %v862 = vshll.u32 %v782, 16
      %v864 = vrot.slane %v862, 1
      %v865 = vor.u32 %v860, %v864
      %v867 = vshrl.u32 %v783, 16
      %v869 = vshll.u32 %v783, 16
      %v871 = vrot.slane %v869, 1
      %v872 = vor.u32 %v867, %v871
      %v874 = vshrl.u32 %v784, 16
      %v876 = vshll.u32 %v784, 16
      %v878 = vrot.slane %v876, 1
      %v879 = vor.u32 %v874, %v878
      %v881 = vshrl.u32 %v785, 16
      %v883 = vshll.u32 %v785, 16
      %v885 = vrot.slane %v883, 1
      %v886 = vor.u32 %v881, %v885
      %v888 = vshrl.u32 %v786, 16
      %v890 = vshll.u32 %v786, 16
      %v892 = vrot.slane %v890, 1
      %v893 = vor.u32 %v888, %v892
      %v895 = vshrl.u32 %v787, 16
      %v897 = vshll.u32 %v787, 16
      %v899 = vrot.slane %v897, 1
      %v900 = vor.u32 %v895, %v899
      %v902 = vshrl.u32 %v788, 16
      %v904 = vshll.u32 %v788, 16
      %v906 = vrot.slane %v904, 1
      %v907 = vor.u32 %v902, %v906
      %v909 = vshrl.u32 %v789, 16
      %v911 = vshll.u32 %v789, 16
      %v913 = vrot.slane %v911, 1
      %v914 = vor.u32 %v909, %v913
      %v916 = vshrl.u32 %v790, 16
      %v918 = vshll.u32 %v790, 16
      %v920 = vrot.slane %v918, 1
      %v921 = vor.u32 %v916, %v920
      %v923 = vshrl.u32 %v791, 16
      %v925 = vshll.u32 %v791, 16
      %v927 = vrot.slane %v925, 1
      %v928 = vor.u32 %v923, %v927
      %v930 = vshrl.u32 %v792, 16
      %v932 = vshll.u32 %v792, 16
      %v934 = vrot.slane %v932, 1
      %v935 = vor.u32 %v930, %v934
      %v937 = vshrl.u32 %v793, 16
      %v939 = vshll.u32 %v793, 16
      %v941 = vrot.slane %v939, 1
      %v942 = vor.u32 %v937, %v941
      %v944 = vshrl.u32 %v794, 16
      %v946 = vshll.u32 %v794, 16
      %v948 = vrot.slane %v946, 1
      %v949 = vor.u32 %v944, %v948
      %v951 = vshrl.u32 %v795, 16
      %v953 = vshll.u32 %v795, 16
      %v955 = vrot.slane %v953, 1
      %v956 = vor.u32 %v951, %v955
      %v958 = vshrl.u32 %v796, 16
      %v960 = vshll.u32 %v796, 16
      %v962 = vrot.slane %v960, 1
      %v963 = vor.u32 %v958, %v962
      %v965 = vshrl.u32 %v797, 16
      %v967 = vshll.u32 %v797, 16
      %v969 = vrot.slane %v967, 1
      %v970 = vor.u32 %v965, %v969
      %vm987 = vcmask 1047552
      %vm988 = vsmask.f32 7424
      %vm989 = vmand %vm987, %vm988
      %v990 = vsel %vm989, %v865, 0
      %v991 = vsel %vm989, %v872, 0
      %v992 = vsel %vm989, %v879, 0
      %v993 = vsel %vm989, %v886, 0
      %v994 = vsel %vm989, %v893, 0
      %v995 = vsel %vm989, %v900, 0
      %v996 = vsel %vm989, %v907, 0
      %v997 = vsel %vm989, %v914, 0
      %v998 = vsel %vm989, %v921, 0
      %v999 = vsel %vm989, %v928, 0
      %v1000 = vsel %vm989, %v935, 0
      %v1001 = vsel %vm989, %v942, 0
      %v1002 = vsel %vm989, %v949, 0
      %v1003 = vsel %vm989, %v956, 0
      %v1004 = vsel %vm989, %v963, 0
      %v1005 = vsel %vm989, %v970, 0
      %v1007 = vshrl.u32 %v858, 16
      %v1009 = vshll.u32 %v858, 16
      %v1011 = vrot.slane %v1009, 1
      %v1012 = vor.u32 %v1007, %v1011
      %v1014 = vsel %vm989, %v1012, 0
      %1031 = vrot.lane.b32.xlu0 %v990, 4
      %v1032 = vpop.permute.xlu0 %1031
      %1033 = vrot.lane.b32.xlu0 %v991, 4
      %v1034 = vpop.permute.xlu0 %1033
      %1035 = vrot.lane.b32.xlu0 %v992, 4
      %v1036 = vpop.permute.xlu0 %1035
      %1037 = vrot.lane.b32.xlu0 %v993, 4
      %v1038 = vpop.permute.xlu0 %1037
      %1039 = vrot.lane.b32.xlu0 %v994, 4
      %v1040 = vpop.permute.xlu0 %1039
      %1041 = vrot.lane.b32.xlu0 %v995, 4
      %v1042 = vpop.permute.xlu0 %1041
      %1043 = vrot.lane.b32.xlu0 %v996, 4
      %v1044 = vpop.permute.xlu0 %1043
      %1045 = vrot.lane.b32.xlu0 %v997, 4
      %v1046 = vpop.permute.xlu0 %1045
      %1047 = vrot.lane.b32.xlu0 %v998, 4
      %v1048 = vpop.permute.xlu0 %1047
      %1049 = vrot.lane.b32.xlu0 %v999, 4
      %v1050 = vpop.permute.xlu0 %1049
      %1051 = vrot.lane.b32.xlu0 %v1000, 4
      %v1052 = vpop.permute.xlu0 %1051
      %1053 = vrot.lane.b32.xlu0 %v1001, 4
      %v1054 = vpop.permute.xlu0 %1053
      %1055 = vrot.lane.b32.xlu0 %v1002, 4
      %v1056 = vpop.permute.xlu0 %1055
      %1057 = vrot.lane.b32.xlu0 %v1003, 4
      %v1058 = vpop.permute.xlu0 %1057
      %1059 = vrot.lane.b32.xlu0 %v1004, 4
      %v1060 = vpop.permute.xlu0 %1059
      %1061 = vrot.lane.b32.xlu0 %v1005, 4
      %v1062 = vpop.permute.xlu0 %1061
      %1079 = vrot.lane.b32.xlu0 %v783, 8
      %v1080 = vpop.permute.xlu0 %1079
      %1081 = vrot.lane.b32.xlu0 %v784, 8
      %v1082 = vpop.permute.xlu0 %1081
      %1083 = vrot.lane.b32.xlu0 %v785, 8
      %v1084 = vpop.permute.xlu0 %1083
      %1085 = vrot.lane.b32.xlu0 %v786, 8
      %v1086 = vpop.permute.xlu0 %1085
      %1087 = vrot.lane.b32.xlu0 %v787, 8
      %v1088 = vpop.permute.xlu0 %1087
      %1089 = vrot.lane.b32.xlu0 %v788, 8
      %v1090 = vpop.permute.xlu0 %1089
      %1091 = vrot.lane.b32.xlu0 %v789, 8
      %v1092 = vpop.permute.xlu0 %1091
      %1093 = vrot.lane.b32.xlu0 %v790, 8
      %v1094 = vpop.permute.xlu0 %1093
      %1095 = vrot.lane.b32.xlu0 %v791, 8
      %v1096 = vpop.permute.xlu0 %1095
      %1097 = vrot.lane.b32.xlu0 %v792, 8
      %v1098 = vpop.permute.xlu0 %1097
      %1099 = vrot.lane.b32.xlu0 %v793, 8
      %v1100 = vpop.permute.xlu0 %1099
      %1101 = vrot.lane.b32.xlu0 %v794, 8
      %v1102 = vpop.permute.xlu0 %1101
      %1103 = vrot.lane.b32.xlu0 %v795, 8
      %v1104 = vpop.permute.xlu0 %1103
      %1105 = vrot.lane.b32.xlu0 %v796, 8
      %v1106 = vpop.permute.xlu0 %1105
      %1107 = vrot.lane.b32.xlu0 %v797, 8
      %v1108 = vpop.permute.xlu0 %1107
      %1109 = vrot.lane.b32.xlu0 %v858, 8
      %v1110 = vpop.permute.xlu0 %1109
      %1112 = vrot.lane.b32.xlu0 %v991, 12
      %v1113 = vpop.permute.xlu0 %1112
      %1114 = vrot.lane.b32.xlu0 %v992, 12
      %v1115 = vpop.permute.xlu0 %1114
      %1116 = vrot.lane.b32.xlu0 %v993, 12
      %v1117 = vpop.permute.xlu0 %1116
      %1118 = vrot.lane.b32.xlu0 %v994, 12
      %v1119 = vpop.permute.xlu0 %1118
      %1120 = vrot.lane.b32.xlu0 %v995, 12
      %v1121 = vpop.permute.xlu0 %1120
      %1122 = vrot.lane.b32.xlu0 %v996, 12
      %v1123 = vpop.permute.xlu0 %1122
      %1124 = vrot.lane.b32.xlu0 %v997, 12
      %v1125 = vpop.permute.xlu0 %1124
      %1126 = vrot.lane.b32.xlu0 %v998, 12
      %v1127 = vpop.permute.xlu0 %1126
      %1128 = vrot.lane.b32.xlu0 %v999, 12
      %v1129 = vpop.permute.xlu0 %1128
      %1130 = vrot.lane.b32.xlu0 %v1000, 12
      %v1131 = vpop.permute.xlu0 %1130
      %1132 = vrot.lane.b32.xlu0 %v1001, 12
      %v1133 = vpop.permute.xlu0 %1132
      %1134 = vrot.lane.b32.xlu0 %v1002, 12
      %v1135 = vpop.permute.xlu0 %1134
      %1136 = vrot.lane.b32.xlu0 %v1003, 12
      %v1137 = vpop.permute.xlu0 %1136
      %1138 = vrot.lane.b32.xlu0 %v1004, 12
      %v1139 = vpop.permute.xlu0 %1138
      %1140 = vrot.lane.b32.xlu0 %v1005, 12
      %v1141 = vpop.permute.xlu0 %1140
      %1142 = vrot.lane.b32.xlu0 %v1014, 12
      %v1143 = vpop.permute.xlu0 %1142
      %vm1144 = vcmask 31744
      %v1146 = vsel %vm1144, %v782, %v1032
      %v1148 = vsel %vm1144, %v783, %v1034
      %v1150 = vsel %vm1144, %v784, %v1036
      %v1152 = vsel %vm1144, %v785, %v1038
      %v1154 = vsel %vm1144, %v786, %v1040
      %v1156 = vsel %vm1144, %v787, %v1042
      %v1158 = vsel %vm1144, %v788, %v1044
      %v1160 = vsel %vm1144, %v789, %v1046
      %v1162 = vsel %vm1144, %v790, %v1048
      %v1164 = vsel %vm1144, %v791, %v1050
      %v1166 = vsel %vm1144, %v792, %v1052
      %v1168 = vsel %vm1144, %v793, %v1054
      %v1170 = vsel %vm1144, %v794, %v1056
      %v1172 = vsel %vm1144, %v795, %v1058
      %v1174 = vsel %vm1144, %v796, %v1060
      %v1176 = vsel %vm1144, %v797, %v1062
      %vm1177 = vcmask 64512
      %v1179 = vsel %vm1177, %v1146, %v1080
      %v1181 = vsel %vm1177, %v1148, %v1082
      %v1183 = vsel %vm1177, %v1150, %v1084
      %v1185 = vsel %vm1177, %v1152, %v1086
      %v1187 = vsel %vm1177, %v1154, %v1088
      %v1189 = vsel %vm1177, %v1156, %v1090
      %v1191 = vsel %vm1177, %v1158, %v1092
      %v1193 = vsel %vm1177, %v1160, %v1094
      %v1195 = vsel %vm1177, %v1162, %v1096
      %v1197 = vsel %vm1177, %v1164, %v1098
      %v1199 = vsel %vm1177, %v1166, %v1100
      %v1201 = vsel %vm1177, %v1168, %v1102
      %v1203 = vsel %vm1177, %v1170, %v1104
      %v1205 = vsel %vm1177, %v1172, %v1106
      %v1207 = vsel %vm1177, %v1174, %v1108
      %v1209 = vsel %vm1177, %v1176, %v1110
      %vm1210 = vcmask 97280
      %v1212 = vsel %vm1210, %v1179, %v1113
      %v1214 = vsel %vm1210, %v1181, %v1115
      %v1216 = vsel %vm1210, %v1183, %v1117
      %v1218 = vsel %vm1210, %v1185, %v1119
      %v1220 = vsel %vm1210, %v1187, %v1121
      %v1222 = vsel %vm1210, %v1189, %v1123
      %v1224 = vsel %vm1210, %v1191, %v1125
      %v1226 = vsel %vm1210, %v1193, %v1127
      %v1228 = vsel %vm1210, %v1195, %v1129
      %v1230 = vsel %vm1210, %v1197, %v1131
      %v1232 = vsel %vm1210, %v1199, %v1133
      %v1234 = vsel %vm1210, %v1201, %v1135
      %v1236 = vsel %vm1210, %v1203, %v1137
      %v1238 = vsel %vm1210, %v1205, %v1139
      %v1240 = vsel %vm1210, %v1207, %v1141
      %v1242 = vsel %vm1210, %v1209, %v1143
      %v1243 = vld [vmem:[%s4] sm:$0xf]
      %v1244 = vld [vmem:[%s4 + $0x4] sm:$0xf]
      %v1245 = vld [vmem:[%s5] sm:$0x1]
      %v1247 = vlaneseq
      %v1248 = vshrl.u32 %v1247, 7
      %v1249 = vsub.s32 0, %v1248
      %v1250 = vrot.slane %v1245, %v1249
      %v1254 = vunpack.c.l.b16 %v1243
      %v1255 = vunpack.c.l.b16 %v1244
      %v1256 = vpack.c.b16 %v1255, %v1254
      %v1258 = vsel %vm540, %v1212, 0
      %v1260 = vsel %vm540, %v1214, 0
      %v1262 = vsel %vm540, %v1216, 0
      %v1264 = vsel %vm540, %v1218, 0
      %v1266 = vsel %vm540, %v1220, 0
      %v1268 = vsel %vm540, %v1222, 0
      %v1270 = vsel %vm540, %v1224, 0
      %v1272 = vsel %vm540, %v1226, 0
      %v1274 = vsel %vm540, %v1228, 0
      %v1276 = vsel %vm540, %v1230, 0
      %v1278 = vsel %vm540, %v1232, 0
      %v1280 = vsel %vm540, %v1234, 0
      %v1282 = vsel %vm540, %v1236, 0
      %v1284 = vsel %vm540, %v1238, 0
      %v1286 = vsel %vm540, %v1240, 0
      %v1288 = vsel %vm540, %v1242, 0
      %1290 = vmatprep.subr.bf16.mxu0 0
      %1291 = vmatpush1.bf16.msra.mxu0 %v1256
      %1292 = vmatprep.subr.bf16.mxu0 0
      %1293 = vmatpush1.bf16.msra.mxu0 0
      %1294 = vmatprep.subr.bf16.mxu0 0
      %1295 = vmatpush1.bf16.msra.mxu0 0
      %1296 = vmatprep.subr.bf16.mxu0 0
      %1297 = vmatpush1.bf16.msra.mxu0 0
      %1298 = vmatprep.subr.bf16.mxu0 0
      %1299 = vmatpush1.bf16.msra.mxu0 0
      %1300 = vmatprep.subr.bf16.mxu0 0
      %1301 = vmatpush1.bf16.msra.mxu0 0
      %1302 = vmatprep.subr.bf16.mxu0 0
      %1303 = vmatpush1.bf16.msra.mxu0 0
      %1304 = vmatprep.subr.bf16.mxu0 0
      %1305 = vmatpush1.bf16.msra.mxu0 0
      %1306 = vmatprep.subr.bf16.mxu0 0
      %1307 = vmatpush1.bf16.msra.mxu0 0
      %1308 = vmatprep.subr.bf16.mxu0 0
      %1309 = vmatpush1.bf16.msra.mxu0 0
      %1310 = vmatprep.subr.bf16.mxu0 0
      %1311 = vmatpush1.bf16.msra.mxu0 0
      %1312 = vmatprep.subr.bf16.mxu0 0
      %1313 = vmatpush1.bf16.msra.mxu0 0
      %1314 = vmatprep.subr.bf16.mxu0 0
      %1315 = vmatpush1.bf16.msra.mxu0 0
      %1316 = vmatprep.subr.bf16.mxu0 0
      %1317 = vmatpush1.bf16.msra.mxu0 0
      %1318 = vmatprep.subr.bf16.mxu0 0
      %1319 = vmatpush1.bf16.msra.mxu0 0
      %1320 = vmatprep.subr.bf16.mxu0 0
      %1321 = vmatpush1.bf16.msra.mxu0 0
      %1322 = vmatprep.mubr.bf16.mxu0 0
      %1323 = vmatmul.mubr.bf16.gmra.mrb[0].mxu0 %v1258
      %v1324 = vpop.f32.mrb[0].mxu0
      %v1325 = vadd.f32 %v1250, %v1324
      %v1326 = vpop.f32.mrb[0].mxu0
      %v1327 = vpop.f32.mrb[0].mxu0
      %v1328 = vadd.f32 %v1250, %v1327
      %v1329 = vpop.f32.mrb[0].mxu0
      %1330 = vmatprep.mubr.bf16.mxu0 0
      %1331 = vmatmul.mubr.bf16.gmra.mrb[0].mxu0 %v1260
      %v1332 = vpop.f32.mrb[0].mxu0
      %v1333 = vadd.f32 %v1250, %v1332
      %v1334 = vpop.f32.mrb[0].mxu0
      %v1335 = vpop.f32.mrb[0].mxu0
      %v1336 = vadd.f32 %v1250, %v1335
      %v1337 = vpop.f32.mrb[0].mxu0
      %1338 = vmatprep.mubr.bf16.mxu0 0
      %1339 = vmatmul.mubr.bf16.gmra.mrb[0].mxu0 %v1262
      %v1340 = vpop.f32.mrb[0].mxu0
      %v1341 = vadd.f32 %v1250, %v1340
      %v1342 = vpop.f32.mrb[0].mxu0
      %v1343 = vpop.f32.mrb[0].mxu0
      %v1344 = vadd.f32 %v1250, %v1343
      %v1345 = vpop.f32.mrb[0].mxu0
      %1346 = vmatprep.mubr.bf16.mxu0 0
      %1347 = vmatmul.mubr.bf16.gmra.mrb[0].mxu0 %v1264
      %v1348 = vpop.f32.mrb[0].mxu0
      %v1349 = vadd.f32 %v1250, %v1348
      %v1350 = vpop.f32.mrb[0].mxu0
      %v1351 = vpop.f32.mrb[0].mxu0
      %v1352 = vadd.f32 %v1250, %v1351
      %v1353 = vpop.f32.mrb[0].mxu0
      %1354 = vmatprep.mubr.bf16.mxu0 0
      %1355 = vmatmul.mubr.bf16.gmra.mrb[0].mxu0 %v1266
      %v1356 = vpop.f32.mrb[0].mxu0
      %v1357 = vadd.f32 %v1250, %v1356
      %v1358 = vpop.f32.mrb[0].mxu0
      %v1359 = vpop.f32.mrb[0].mxu0
      %v1360 = vadd.f32 %v1250, %v1359
      %v1361 = vpop.f32.mrb[0].mxu0
      %1362 = vmatprep.mubr.bf16.mxu0 0
      %1363 = vmatmul.mubr.bf16.gmra.mrb[0].mxu0 %v1268
      %v1364 = vpop.f32.mrb[0].mxu0
      %v1365 = vadd.f32 %v1250, %v1364
      %v1366 = vpop.f32.mrb[0].mxu0
      %v1367 = vpop.f32.mrb[0].mxu0
      %v1368 = vadd.f32 %v1250, %v1367
      %v1369 = vpop.f32.mrb[0].mxu0
      %1370 = vmatprep.mubr.bf16.mxu0 0
      %1371 = vmatmul.mubr.bf16.gmra.mrb[0].mxu0 %v1270
      %v1372 = vpop.f32.mrb[0].mxu0
      %v1373 = vadd.f32 %v1250, %v1372
      %v1374 = vpop.f32.mrb[0].mxu0
      %v1375 = vpop.f32.mrb[0].mxu0
      %v1376 = vadd.f32 %v1250, %v1375
      %v1377 = vpop.f32.mrb[0].mxu0
      %1378 = vmatprep.mubr.bf16.mxu0 0
      %1379 = vmatmul.mubr.bf16.gmra.mrb[0].mxu0 %v1272
      %v1380 = vpop.f32.mrb[0].mxu0
      %v1381 = vadd.f32 %v1250, %v1380
      %v1382 = vpop.f32.mrb[0].mxu0
      %v1383 = vpop.f32.mrb[0].mxu0
      %v1384 = vadd.f32 %v1250, %v1383
      %v1385 = vpop.f32.mrb[0].mxu0
      %1386 = vmatprep.mubr.bf16.mxu0 0
      %1387 = vmatmul.mubr.bf16.gmra.mrb[0].mxu0 %v1274
      %v1388 = vpop.f32.mrb[0].mxu0
      %v1389 = vadd.f32 %v1250, %v1388
      %v1390 = vpop.f32.mrb[0].mxu0
      %v1391 = vpop.f32.mrb[0].mxu0
      %v1392 = vadd.f32 %v1250, %v1391
      %v1393 = vpop.f32.mrb[0].mxu0
      %1394 = vmatprep.mubr.bf16.mxu0 0
      %1395 = vmatmul.mubr.bf16.gmra.mrb[0].mxu0 %v1276
      %v1396 = vpop.f32.mrb[0].mxu0
      %v1397 = vadd.f32 %v1250, %v1396
      %v1398 = vpop.f32.mrb[0].mxu0
      %v1399 = vpop.f32.mrb[0].mxu0
      %v1400 = vadd.f32 %v1250, %v1399
      %v1401 = vpop.f32.mrb[0].mxu0
      %1402 = vmatprep.mubr.bf16.mxu0 0
      %1403 = vmatmul.mubr.bf16.gmra.mrb[0].mxu0 %v1278
      %v1404 = vpop.f32.mrb[0].mxu0
      %v1405 = vadd.f32 %v1250, %v1404
      %v1406 = vpop.f32.mrb[0].mxu0
      %v1407 = vpop.f32.mrb[0].mxu0
      %v1408 = vadd.f32 %v1250, %v1407
      %v1409 = vpop.f32.mrb[0].mxu0
      %1410 = vmatprep.mubr.bf16.mxu0 0
      %1411 = vmatmul.mubr.bf16.gmra.mrb[0].mxu0 %v1280
      %v1412 = vpop.f32.mrb[0].mxu0
      %v1413 = vadd.f32 %v1250, %v1412
      %v1414 = vpop.f32.mrb[0].mxu0
      %v1415 = vpop.f32.mrb[0].mxu0
      %v1416 = vadd.f32 %v1250, %v1415
      %v1417 = vpop.f32.mrb[0].mxu0
      %1418 = vmatprep.mubr.bf16.mxu0 0
      %1419 = vmatmul.mubr.bf16.gmra.mrb[0].mxu0 %v1282
      %v1420 = vpop.f32.mrb[0].mxu0
      %v1421 = vadd.f32 %v1250, %v1420
      %v1422 = vpop.f32.mrb[0].mxu0
      %v1423 = vpop.f32.mrb[0].mxu0
      %v1424 = vadd.f32 %v1250, %v1423
      %v1425 = vpop.f32.mrb[0].mxu0
      %1426 = vmatprep.mubr.bf16.mxu0 0
      %1427 = vmatmul.mubr.bf16.gmra.mrb[0].mxu0 %v1284
      %v1428 = vpop.f32.mrb[0].mxu0
      %v1429 = vadd.f32 %v1250, %v1428
      %v1430 = vpop.f32.mrb[0].mxu0
      %v1431 = vpop.f32.mrb[0].mxu0
      %v1432 = vadd.f32 %v1250, %v1431
      %v1433 = vpop.f32.mrb[0].mxu0
      %1434 = vmatprep.mubr.bf16.mxu0 0
      %1435 = vmatmul.mubr.bf16.gmra.mrb[0].mxu0 %v1286
      %v1436 = vpop.f32.mrb[0].mxu0
      %v1437 = vadd.f32 %v1250, %v1436
      %v1438 = vpop.f32.mrb[0].mxu0
      %v1439 = vpop.f32.mrb[0].mxu0
      %v1440 = vadd.f32 %v1250, %v1439
      %v1441 = vpop.f32.mrb[0].mxu0
      %1442 = vmatprep.mubr.bf16.mxu0 0
      %1443 = vmatmul.mubr.bf16.gmra.mrb[0].mxu0 %v1288
      %v1444 = vpop.f32.mrb[0].mxu0
      %v1445 = vadd.f32 %v1250, %v1444
      %v1446 = vpop.f32.mrb[0].mxu0
      %v1447 = vpop.f32.mrb[0].mxu0
      %v1448 = vadd.f32 %v1250, %v1447
      %v1449 = vpop.f32.mrb[0].mxu0
      %1450 = vdwg.mxu0
      %v1451 = vmax.f32 %v1325, 0.0
      %v1452 = vmax.f32 %v1328, 0.0
      %v1453 = vmax.f32 %v1333, 0.0
      %v1454 = vmax.f32 %v1336, 0.0
      %v1455 = vmax.f32 %v1341, 0.0
      %v1456 = vmax.f32 %v1344, 0.0
      %v1457 = vmax.f32 %v1349, 0.0
      %v1458 = vmax.f32 %v1352, 0.0
      %v1459 = vmax.f32 %v1357, 0.0
      %v1460 = vmax.f32 %v1360, 0.0
      %v1461 = vmax.f32 %v1365, 0.0
      %v1462 = vmax.f32 %v1368, 0.0
      %v1463 = vmax.f32 %v1373, 0.0
      %v1464 = vmax.f32 %v1376, 0.0
      %v1465 = vmax.f32 %v1381, 0.0
      %v1466 = vmax.f32 %v1384, 0.0
      %v1467 = vmax.f32 %v1389, 0.0
      %v1468 = vmax.f32 %v1392, 0.0
      %v1469 = vmax.f32 %v1397, 0.0
      %v1470 = vmax.f32 %v1400, 0.0
      %v1471 = vmax.f32 %v1405, 0.0
      %v1472 = vmax.f32 %v1408, 0.0
      %v1473 = vmax.f32 %v1413, 0.0
      %v1474 = vmax.f32 %v1416, 0.0
      %v1475 = vmax.f32 %v1421, 0.0
      %v1476 = vmax.f32 %v1424, 0.0
      %v1477 = vmax.f32 %v1429, 0.0
      %v1478 = vmax.f32 %v1432, 0.0
      %v1479 = vmax.f32 %v1437, 0.0
      %v1480 = vmax.f32 %v1440, 0.0
      %v1481 = vmax.f32 %v1445, 0.0
      %v1482 = vmax.f32 %v1448, 0.0
      %v1483 = vpack.c.bf16 %v1452, %v1451
      %v1484 = vpack.c.bf16 %v1454, %v1453
      %v1485 = vpack.c.bf16 %v1456, %v1455
      %v1486 = vpack.c.bf16 %v1458, %v1457
      %v1487 = vpack.c.bf16 %v1460, %v1459
      %v1488 = vpack.c.bf16 %v1462, %v1461
      %v1489 = vpack.c.bf16 %v1464, %v1463
      %v1490 = vpack.c.bf16 %v1466, %v1465
      %v1491 = vpack.c.bf16 %v1468, %v1467
      %v1492 = vpack.c.bf16 %v1470, %v1469
      %v1493 = vpack.c.bf16 %v1472, %v1471
      %v1494 = vpack.c.bf16 %v1474, %v1473
      %v1495 = vpack.c.bf16 %v1476, %v1475
      %v1496 = vpack.c.bf16 %v1478, %v1477
      %v1497 = vpack.c.bf16 %v1480, %v1479
      %v1498 = vpack.c.bf16 %v1482, %v1481
      %v1499 = vld [vmem:[%s6] sm:$0x3]
      %v1500 = vld [vmem:[%s7] sm:$0x1]
      %v1502 = vlaneseq
      %v1503 = vshrl.u32 %v1502, 7
      %v1504 = vsub.s32 0, %v1503
      %v1505 = vrot.slane %v1500, %v1504
      %v1508 = vsel %vm1144, %v1483, 0
      %v1511 = vsel %vm1144, %v1484, 0
      %v1514 = vsel %vm1144, %v1485, 0
      %v1517 = vsel %vm1144, %v1486, 0
      %v1520 = vsel %vm1144, %v1487, 0
      %v1523 = vsel %vm1144, %v1488, 0
      %v1526 = vsel %vm1144, %v1489, 0
      %v1529 = vsel %vm1144, %v1490, 0
      %v1532 = vsel %vm1144, %v1491, 0
      %v1535 = vsel %vm1144, %v1492, 0
      %v1538 = vsel %vm1144, %v1493, 0
      %v1541 = vsel %vm1144, %v1494, 0
      %v1544 = vsel %vm1144, %v1495, 0
      %v1547 = vsel %vm1144, %v1496, 0
      %v1550 = vsel %vm1144, %v1497, 0
      %v1553 = vsel %vm1144, %v1498, 0
      %vm1555 = vcmask 1041408
      %v1557 = vsel %vm1555, %v1499, 0
      %1559 = vmatprep.subr.bf16.mxu0 0
      %1560 = vmatpush1.bf16.msra.mxu0 %v1557
      %1561 = vmatprep.subr.bf16.mxu0 0
      %1562 = vmatpush1.bf16.msra.mxu0 0
      %1563 = vmatprep.subr.bf16.mxu0 0
      %1564 = vmatpush1.bf16.msra.mxu0 0
      %1565 = vmatprep.subr.bf16.mxu0 0
      %1566 = vmatpush1.bf16.msra.mxu0 0
      %1567 = vmatprep.subr.bf16.mxu0 0
      %1568 = vmatpush1.bf16.msra.mxu0 0
      %1569 = vmatprep.subr.bf16.mxu0 0
      %1570 = vmatpush1.bf16.msra.mxu0 0
      %1571 = vmatprep.subr.bf16.mxu0 0
      %1572 = vmatpush1.bf16.msra.mxu0 0
      %1573 = vmatprep.subr.bf16.mxu0 0
      %1574 = vmatpush1.bf16.msra.mxu0 0
      %1575 = vmatprep.subr.bf16.mxu0 0
      %1576 = vmatpush1.bf16.msra.mxu0 0
      %1577 = vmatprep.subr.bf16.mxu0 0
      %1578 = vmatpush1.bf16.msra.mxu0 0
      %1579 = vmatprep.subr.bf16.mxu0 0
      %1580 = vmatpush1.bf16.msra.mxu0 0
      %1581 = vmatprep.subr.bf16.mxu0 0
      %1582 = vmatpush1.bf16.msra.mxu0 0
      %1583 = vmatprep.subr.bf16.mxu0 0
      %1584 = vmatpush1.bf16.msra.mxu0 0
      %1585 = vmatprep.subr.bf16.mxu0 0
      %1586 = vmatpush1.bf16.msra.mxu0 0
      %1587 = vmatprep.subr.bf16.mxu0 0
      %1588 = vmatpush1.bf16.msra.mxu0 0
      %1589 = vmatprep.subr.bf16.mxu0 0
      %1590 = vmatpush1.bf16.msra.mxu0 0
      %1591 = vmatprep.mubr.bf16.mxu0 0
      %1592 = vmatmul.mubr.bf16.gmra.mrb[0].mxu0 %v1508
      %v1593 = vpop.f32.mrb[0].mxu0
      %v1594 = vadd.f32 %v1505, %v1593
      %v1595 = vpop.f32.mrb[0].mxu0
      %v1596 = vpop.f32.mrb[0].mxu0
      %v1597 = vadd.f32 %v1505, %v1596
      %v1598 = vpop.f32.mrb[0].mxu0
      %1599 = vmatprep.mubr.bf16.mxu0 0
      %1600 = vmatmul.mubr.bf16.gmra.mrb[0].mxu0 %v1511
      %v1601 = vpop.f32.mrb[0].mxu0
      %v1602 = vadd.f32 %v1505, %v1601
      %v1603 = vpop.f32.mrb[0].mxu0
      %v1604 = vpop.f32.mrb[0].mxu0
      %v1605 = vadd.f32 %v1505, %v1604
      %v1606 = vpop.f32.mrb[0].mxu0
      %1607 = vmatprep.mubr.bf16.mxu0 0
      %1608 = vmatmul.mubr.bf16.gmra.mrb[0].mxu0 %v1514
      %v1609 = vpop.f32.mrb[0].mxu0
      %v1610 = vadd.f32 %v1505, %v1609
      %v1611 = vpop.f32.mrb[0].mxu0
      %v1612 = vpop.f32.mrb[0].mxu0
      %v1613 = vadd.f32 %v1505, %v1612
      %v1614 = vpop.f32.mrb[0].mxu0
      %1615 = vmatprep.mubr.bf16.mxu0 0
      %1616 = vmatmul.mubr.bf16.gmra.mrb[0].mxu0 %v1517
      %v1617 = vpop.f32.mrb[0].mxu0
      %v1618 = vadd.f32 %v1505, %v1617
      %v1619 = vpop.f32.mrb[0].mxu0
      %v1620 = vpop.f32.mrb[0].mxu0
      %v1621 = vadd.f32 %v1505, %v1620
      %v1622 = vpop.f32.mrb[0].mxu0
      %1623 = vmatprep.mubr.bf16.mxu0 0
      %1624 = vmatmul.mubr.bf16.gmra.mrb[0].mxu0 %v1520
      %v1625 = vpop.f32.mrb[0].mxu0
      %v1626 = vadd.f32 %v1505, %v1625
      %v1627 = vpop.f32.mrb[0].mxu0
      %v1628 = vpop.f32.mrb[0].mxu0
      %v1629 = vadd.f32 %v1505, %v1628
      %v1630 = vpop.f32.mrb[0].mxu0
      %1631 = vmatprep.mubr.bf16.mxu0 0
      %1632 = vmatmul.mubr.bf16.gmra.mrb[0].mxu0 %v1523
      %v1633 = vpop.f32.mrb[0].mxu0
      %v1634 = vadd.f32 %v1505, %v1633
      %v1635 = vpop.f32.mrb[0].mxu0
      %v1636 = vpop.f32.mrb[0].mxu0
      %v1637 = vadd.f32 %v1505, %v1636
      %v1638 = vpop.f32.mrb[0].mxu0
      %1639 = vmatprep.mubr.bf16.mxu0 0
      %1640 = vmatmul.mubr.bf16.gmra.mrb[0].mxu0 %v1526
      %v1641 = vpop.f32.mrb[0].mxu0
      %v1642 = vadd.f32 %v1505, %v1641
      %v1643 = vpop.f32.mrb[0].mxu0
      %v1644 = vpop.f32.mrb[0].mxu0
      %v1645 = vadd.f32 %v1505, %v1644
      %v1646 = vpop.f32.mrb[0].mxu0
      %1647 = vmatprep.mubr.bf16.mxu0 0
      %1648 = vmatmul.mubr.bf16.gmra.mrb[0].mxu0 %v1529
      %v1649 = vpop.f32.mrb[0].mxu0
      %v1650 = vadd.f32 %v1505, %v1649
      %v1651 = vpop.f32.mrb[0].mxu0
      %v1652 = vpop.f32.mrb[0].mxu0
      %v1653 = vadd.f32 %v1505, %v1652
      %v1654 = vpop.f32.mrb[0].mxu0
      %1655 = vmatprep.mubr.bf16.mxu0 0
      %1656 = vmatmul.mubr.bf16.gmra.mrb[0].mxu0 %v1532
      %v1657 = vpop.f32.mrb[0].mxu0
      %v1658 = vadd.f32 %v1505, %v1657
      %v1659 = vpop.f32.mrb[0].mxu0
      %v1660 = vpop.f32.mrb[0].mxu0
      %v1661 = vadd.f32 %v1505, %v1660
      %v1662 = vpop.f32.mrb[0].mxu0
      %1663 = vmatprep.mubr.bf16.mxu0 0
      %1664 = vmatmul.mubr.bf16.gmra.mrb[0].mxu0 %v1535
      %v1665 = vpop.f32.mrb[0].mxu0
      %v1666 = vadd.f32 %v1505, %v1665
      %v1667 = vpop.f32.mrb[0].mxu0
      %v1668 = vpop.f32.mrb[0].mxu0
      %v1669 = vadd.f32 %v1505, %v1668
      %v1670 = vpop.f32.mrb[0].mxu0
      %1671 = vmatprep.mubr.bf16.mxu0 0
      %1672 = vmatmul.mubr.bf16.gmra.mrb[0].mxu0 %v1538
      %v1673 = vpop.f32.mrb[0].mxu0
      %v1674 = vadd.f32 %v1505, %v1673
      %v1675 = vpop.f32.mrb[0].mxu0
      %v1676 = vpop.f32.mrb[0].mxu0
      %v1677 = vadd.f32 %v1505, %v1676
      %v1678 = vpop.f32.mrb[0].mxu0
      %1679 = vmatprep.mubr.bf16.mxu0 0
      %1680 = vmatmul.mubr.bf16.gmra.mrb[0].mxu0 %v1541
      %v1681 = vpop.f32.mrb[0].mxu0
      %v1682 = vadd.f32 %v1505, %v1681
      %v1683 = vpop.f32.mrb[0].mxu0
      %v1684 = vpop.f32.mrb[0].mxu0
      %v1685 = vadd.f32 %v1505, %v1684
      %v1686 = vpop.f32.mrb[0].mxu0
      %1687 = vmatprep.mubr.bf16.mxu0 0
      %1688 = vmatmul.mubr.bf16.gmra.mrb[0].mxu0 %v1544
      %v1689 = vpop.f32.mrb[0].mxu0
      %v1690 = vadd.f32 %v1505, %v1689
      %v1691 = vpop.f32.mrb[0].mxu0
      %v1692 = vpop.f32.mrb[0].mxu0
      %v1693 = vadd.f32 %v1505, %v1692
      %v1694 = vpop.f32.mrb[0].mxu0
      %1695 = vmatprep.mubr.bf16.mxu0 0
      %1696 = vmatmul.mubr.bf16.gmra.mrb[0].mxu0 %v1547
      %v1697 = vpop.f32.mrb[0].mxu0
      %v1698 = vadd.f32 %v1505, %v1697
      %v1699 = vpop.f32.mrb[0].mxu0
      %v1700 = vpop.f32.mrb[0].mxu0
      %v1701 = vadd.f32 %v1505, %v1700
      %v1702 = vpop.f32.mrb[0].mxu0
      %1703 = vmatprep.mubr.bf16.mxu0 0
      %1704 = vmatmul.mubr.bf16.gmra.mrb[0].mxu0 %v1550
      %v1705 = vpop.f32.mrb[0].mxu0
      %v1706 = vadd.f32 %v1505, %v1705
      %v1707 = vpop.f32.mrb[0].mxu0
      %v1708 = vpop.f32.mrb[0].mxu0
      %v1709 = vadd.f32 %v1505, %v1708
      %v1710 = vpop.f32.mrb[0].mxu0
      %1711 = vmatprep.mubr.bf16.mxu0 0
      %1712 = vmatmul.mubr.bf16.gmra.mrb[0].mxu0 %v1553
      %v1713 = vpop.f32.mrb[0].mxu0
      %v1714 = vadd.f32 %v1505, %v1713
      %v1715 = vpop.f32.mrb[0].mxu0
      %v1716 = vpop.f32.mrb[0].mxu0
      %v1717 = vadd.f32 %v1505, %v1716
      %v1718 = vpop.f32.mrb[0].mxu0
      %1719 = vdwg.mxu0
      %v1720 = vmax.f32 %v1594, 0.0
      %v1721 = vmax.f32 %v1597, 0.0
      %v1722 = vmax.f32 %v1602, 0.0
      %v1723 = vmax.f32 %v1605, 0.0
      %v1724 = vmax.f32 %v1610, 0.0
      %v1725 = vmax.f32 %v1613, 0.0
      %v1726 = vmax.f32 %v1618, 0.0
      %v1727 = vmax.f32 %v1621, 0.0
      %v1728 = vmax.f32 %v1626, 0.0
      %v1729 = vmax.f32 %v1629, 0.0
      %v1730 = vmax.f32 %v1634, 0.0
      %v1731 = vmax.f32 %v1637, 0.0
      %v1732 = vmax.f32 %v1642, 0.0
      %v1733 = vmax.f32 %v1645, 0.0
      %v1734 = vmax.f32 %v1650, 0.0
      %v1735 = vmax.f32 %v1653, 0.0
      %v1736 = vmax.f32 %v1658, 0.0
      %v1737 = vmax.f32 %v1661, 0.0
      %v1738 = vmax.f32 %v1666, 0.0
      %v1739 = vmax.f32 %v1669, 0.0
      %v1740 = vmax.f32 %v1674, 0.0
      %v1741 = vmax.f32 %v1677, 0.0
      %v1742 = vmax.f32 %v1682, 0.0
      %v1743 = vmax.f32 %v1685, 0.0
      %v1744 = vmax.f32 %v1690, 0.0
      %v1745 = vmax.f32 %v1693, 0.0
      %v1746 = vmax.f32 %v1698, 0.0
      %v1747 = vmax.f32 %v1701, 0.0
      %v1748 = vmax.f32 %v1706, 0.0
      %v1749 = vmax.f32 %v1709, 0.0
      %v1750 = vmax.f32 %v1714, 0.0
      %v1751 = vmax.f32 %v1717, 0.0
      %v1752 = vpack.c.bf16 %v1721, %v1720
      %v1753 = vpack.c.bf16 %v1723, %v1722
      %v1754 = vpack.c.bf16 %v1725, %v1724
      %v1755 = vpack.c.bf16 %v1727, %v1726
      %v1756 = vpack.c.bf16 %v1729, %v1728
      %v1757 = vpack.c.bf16 %v1731, %v1730
      %v1758 = vpack.c.bf16 %v1733, %v1732
      %v1759 = vpack.c.bf16 %v1735, %v1734
      %v1760 = vpack.c.bf16 %v1737, %v1736
      %v1761 = vpack.c.bf16 %v1739, %v1738
      %v1762 = vpack.c.bf16 %v1741, %v1740
      %v1763 = vpack.c.bf16 %v1743, %v1742
      %v1764 = vpack.c.bf16 %v1745, %v1744
      %v1765 = vpack.c.bf16 %v1747, %v1746
      %v1766 = vpack.c.bf16 %v1749, %v1748
      %v1767 = vpack.c.bf16 %v1751, %v1750
      %1784 = vrot.lane.b32.xlu0 %v1483, 124
      %v1785 = vpop.permute.xlu0 %1784
      %1786 = vrot.lane.b32.xlu0 %v1484, 124
      %v1787 = vpop.permute.xlu0 %1786
      %1788 = vrot.lane.b32.xlu0 %v1485, 124
      %v1789 = vpop.permute.xlu0 %1788
      %1790 = vrot.lane.b32.xlu0 %v1486, 124
      %v1791 = vpop.permute.xlu0 %1790
      %1792 = vrot.lane.b32.xlu0 %v1487, 124
      %v1793 = vpop.permute.xlu0 %1792
      %1794 = vrot.lane.b32.xlu0 %v1488, 124
      %v1795 = vpop.permute.xlu0 %1794
      %1796 = vrot.lane.b32.xlu0 %v1489, 124
      %v1797 = vpop.permute.xlu0 %1796
      %1798 = vrot.lane.b32.xlu0 %v1490, 124
      %v1799 = vpop.permute.xlu0 %1798
      %1800 = vrot.lane.b32.xlu0 %v1491, 124
      %v1801 = vpop.permute.xlu0 %1800
      %1802 = vrot.lane.b32.xlu0 %v1492, 124
      %v1803 = vpop.permute.xlu0 %1802
      %1804 = vrot.lane.b32.xlu0 %v1493, 124
      %v1805 = vpop.permute.xlu0 %1804
      %1806 = vrot.lane.b32.xlu0 %v1494, 124
      %v1807 = vpop.permute.xlu0 %1806
      %1808 = vrot.lane.b32.xlu0 %v1495, 124
      %v1809 = vpop.permute.xlu0 %1808
      %1810 = vrot.lane.b32.xlu0 %v1496, 124
      %v1811 = vpop.permute.xlu0 %1810
      %1812 = vrot.lane.b32.xlu0 %v1497, 124
      %v1813 = vpop.permute.xlu0 %1812
      %1814 = vrot.lane.b32.xlu0 %v1498, 124
      %v1815 = vpop.permute.xlu0 %1814
      %v1817 = vsel %vm1144, %v1785, 0
      %v1820 = vsel %vm1144, %v1787, 0
      %v1823 = vsel %vm1144, %v1789, 0
      %v1826 = vsel %vm1144, %v1791, 0
      %v1829 = vsel %vm1144, %v1793, 0
      %v1832 = vsel %vm1144, %v1795, 0
      %v1835 = vsel %vm1144, %v1797, 0
      %v1838 = vsel %vm1144, %v1799, 0
      %v1841 = vsel %vm1144, %v1801, 0
      %v1844 = vsel %vm1144, %v1803, 0
      %v1847 = vsel %vm1144, %v1805, 0
      %v1850 = vsel %vm1144, %v1807, 0
      %v1853 = vsel %vm1144, %v1809, 0
      %v1856 = vsel %vm1144, %v1811, 0
      %v1859 = vsel %vm1144, %v1813, 0
      %v1862 = vsel %vm1144, %v1815, 0
      %1864 = vmatprep.subr.bf16.mxu0 0
      %1865 = vmatpush1.bf16.msra.mxu0 %v1557
      %1866 = vmatprep.subr.bf16.mxu0 0
      %1867 = vmatpush1.bf16.msra.mxu0 0
      %1868 = vmatprep.subr.bf16.mxu0 0
      %1869 = vmatpush1.bf16.msra.mxu0 0
      %1870 = vmatprep.subr.bf16.mxu0 0
      %1871 = vmatpush1.bf16.msra.mxu0 0
      %1872 = vmatprep.subr.bf16.mxu0 0
      %1873 = vmatpush1.bf16.msra.mxu0 0
      %1874 = vmatprep.subr.bf16.mxu0 0
      %1875 = vmatpush1.bf16.msra.mxu0 0
      %1876 = vmatprep.subr.bf16.mxu0 0
      %1877 = vmatpush1.bf16.msra.mxu0 0
      %1878 = vmatprep.subr.bf16.mxu0 0
      %1879 = vmatpush1.bf16.msra.mxu0 0
      %1880 = vmatprep.subr.bf16.mxu0 0
      %1881 = vmatpush1.bf16.msra.mxu0 0
      %1882 = vmatprep.subr.bf16.mxu0 0
      %1883 = vmatpush1.bf16.msra.mxu0 0
      %1884 = vmatprep.subr.bf16.mxu0 0
      %1885 = vmatpush1.bf16.msra.mxu0 0
      %1886 = vmatprep.subr.bf16.mxu0 0
      %1887 = vmatpush1.bf16.msra.mxu0 0
      %1888 = vmatprep.subr.bf16.mxu0 0
      %1889 = vmatpush1.bf16.msra.mxu0 0
      %1890 = vmatprep.subr.bf16.mxu0 0
      %1891 = vmatpush1.bf16.msra.mxu0 0
      %1892 = vmatprep.subr.bf16.mxu0 0
      %1893 = vmatpush1.bf16.msra.mxu0 0
      %1894 = vmatprep.subr.bf16.mxu0 0
      %1895 = vmatpush1.bf16.msra.mxu0 0
      %1896 = vmatprep.mubr.bf16.mxu0 0
      %1897 = vmatmul.mubr.bf16.gmra.mrb[0].mxu0 %v1817
      %v1898 = vpop.f32.mrb[0].mxu0
      %v1899 = vadd.f32 %v1505, %v1898
      %v1900 = vpop.f32.mrb[0].mxu0
      %v1901 = vpop.f32.mrb[0].mxu0
      %v1902 = vadd.f32 %v1505, %v1901
      %v1903 = vpop.f32.mrb[0].mxu0
      %1904 = vmatprep.mubr.bf16.mxu0 0
      %1905 = vmatmul.mubr.bf16.gmra.mrb[0].mxu0 %v1820
      %v1906 = vpop.f32.mrb[0].mxu0
      %v1907 = vadd.f32 %v1505, %v1906
      %v1908 = vpop.f32.mrb[0].mxu0
      %v1909 = vpop.f32.mrb[0].mxu0
      %v1910 = vadd.f32 %v1505, %v1909
      %v1911 = vpop.f32.mrb[0].mxu0
      %1912 = vmatprep.mubr.bf16.mxu0 0
      %1913 = vmatmul.mubr.bf16.gmra.mrb[0].mxu0 %v1823
      %v1914 = vpop.f32.mrb[0].mxu0
      %v1915 = vadd.f32 %v1505, %v1914
      %v1916 = vpop.f32.mrb[0].mxu0
      %v1917 = vpop.f32.mrb[0].mxu0
      %v1918 = vadd.f32 %v1505, %v1917
      %v1919 = vpop.f32.mrb[0].mxu0
      %1920 = vmatprep.mubr.bf16.mxu0 0
      %1921 = vmatmul.mubr.bf16.gmra.mrb[0].mxu0 %v1826
      %v1922 = vpop.f32.mrb[0].mxu0
      %v1923 = vadd.f32 %v1505, %v1922
      %v1924 = vpop.f32.mrb[0].mxu0
      %v1925 = vpop.f32.mrb[0].mxu0
      %v1926 = vadd.f32 %v1505, %v1925
      %v1927 = vpop.f32.mrb[0].mxu0
      %1928 = vmatprep.mubr.bf16.mxu0 0
      %1929 = vmatmul.mubr.bf16.gmra.mrb[0].mxu0 %v1829
      %v1930 = vpop.f32.mrb[0].mxu0
      %v1931 = vadd.f32 %v1505, %v1930
      %v1932 = vpop.f32.mrb[0].mxu0
      %v1933 = vpop.f32.mrb[0].mxu0
      %v1934 = vadd.f32 %v1505, %v1933
      %v1935 = vpop.f32.mrb[0].mxu0
      %1936 = vmatprep.mubr.bf16.mxu0 0
      %1937 = vmatmul.mubr.bf16.gmra.mrb[0].mxu0 %v1832
      %v1938 = vpop.f32.mrb[0].mxu0
      %v1939 = vadd.f32 %v1505, %v1938
      %v1940 = vpop.f32.mrb[0].mxu0
      %v1941 = vpop.f32.mrb[0].mxu0
      %v1942 = vadd.f32 %v1505, %v1941
      %v1943 = vpop.f32.mrb[0].mxu0
      %1944 = vmatprep.mubr.bf16.mxu0 0
      %1945 = vmatmul.mubr.bf16.gmra.mrb[0].mxu0 %v1835
      %v1946 = vpop.f32.mrb[0].mxu0
      %v1947 = vadd.f32 %v1505, %v1946
      %v1948 = vpop.f32.mrb[0].mxu0
      %v1949 = vpop.f32.mrb[0].mxu0
      %v1950 = vadd.f32 %v1505, %v1949
      %v1951 = vpop.f32.mrb[0].mxu0
      %1952 = vmatprep.mubr.bf16.mxu0 0
      %1953 = vmatmul.mubr.bf16.gmra.mrb[0].mxu0 %v1838
      %v1954 = vpop.f32.mrb[0].mxu0
      %v1955 = vadd.f32 %v1505, %v1954
      %v1956 = vpop.f32.mrb[0].mxu0
      %v1957 = vpop.f32.mrb[0].mxu0
      %v1958 = vadd.f32 %v1505, %v1957
      %v1959 = vpop.f32.mrb[0].mxu0
      %1960 = vmatprep.mubr.bf16.mxu0 0
      %1961 = vmatmul.mubr.bf16.gmra.mrb[0].mxu0 %v1841
      %v1962 = vpop.f32.mrb[0].mxu0
      %v1963 = vadd.f32 %v1505, %v1962
      %v1964 = vpop.f32.mrb[0].mxu0
      %v1965 = vpop.f32.mrb[0].mxu0
      %v1966 = vadd.f32 %v1505, %v1965
      %v1967 = vpop.f32.mrb[0].mxu0
      %1968 = vmatprep.mubr.bf16.mxu0 0
      %1969 = vmatmul.mubr.bf16.gmra.mrb[0].mxu0 %v1844
      %v1970 = vpop.f32.mrb[0].mxu0
      %v1971 = vadd.f32 %v1505, %v1970
      %v1972 = vpop.f32.mrb[0].mxu0
      %v1973 = vpop.f32.mrb[0].mxu0
      %v1974 = vadd.f32 %v1505, %v1973
      %v1975 = vpop.f32.mrb[0].mxu0
      %1976 = vmatprep.mubr.bf16.mxu0 0
      %1977 = vmatmul.mubr.bf16.gmra.mrb[0].mxu0 %v1847
      %v1978 = vpop.f32.mrb[0].mxu0
      %v1979 = vadd.f32 %v1505, %v1978
      %v1980 = vpop.f32.mrb[0].mxu0
      %v1981 = vpop.f32.mrb[0].mxu0
      %v1982 = vadd.f32 %v1505, %v1981
      %v1983 = vpop.f32.mrb[0].mxu0
      %1984 = vmatprep.mubr.bf16.mxu0 0
      %1985 = vmatmul.mubr.bf16.gmra.mrb[0].mxu0 %v1850
      %v1986 = vpop.f32.mrb[0].mxu0
      %v1987 = vadd.f32 %v1505, %v1986
      %v1988 = vpop.f32.mrb[0].mxu0
      %v1989 = vpop.f32.mrb[0].mxu0
      %v1990 = vadd.f32 %v1505, %v1989
      %v1991 = vpop.f32.mrb[0].mxu0
      %1992 = vmatprep.mubr.bf16.mxu0 0
      %1993 = vmatmul.mubr.bf16.gmra.mrb[0].mxu0 %v1853
      %v1994 = vpop.f32.mrb[0].mxu0
      %v1995 = vadd.f32 %v1505, %v1994
      %v1996 = vpop.f32.mrb[0].mxu0
      %v1997 = vpop.f32.mrb[0].mxu0
      %v1998 = vadd.f32 %v1505, %v1997
      %v1999 = vpop.f32.mrb[0].mxu0
      %2000 = vmatprep.mubr.bf16.mxu0 0
      %2001 = vmatmul.mubr.bf16.gmra.mrb[0].mxu0 %v1856
      %v2002 = vpop.f32.mrb[0].mxu0
      %v2003 = vadd.f32 %v1505, %v2002
      %v2004 = vpop.f32.mrb[0].mxu0
      %v2005 = vpop.f32.mrb[0].mxu0
      %v2006 = vadd.f32 %v1505, %v2005
      %v2007 = vpop.f32.mrb[0].mxu0
      %2008 = vmatprep.mubr.bf16.mxu0 0
      %2009 = vmatmul.mubr.bf16.gmra.mrb[0].mxu0 %v1859
      %v2010 = vpop.f32.mrb[0].mxu0
      %v2011 = vadd.f32 %v1505, %v2010
      %v2012 = vpop.f32.mrb[0].mxu0
      %v2013 = vpop.f32.mrb[0].mxu0
      %v2014 = vadd.f32 %v1505, %v2013
      %v2015 = vpop.f32.mrb[0].mxu0
      %2016 = vmatprep.mubr.bf16.mxu0 0
      %2017 = vmatmul.mubr.bf16.gmra.mrb[0].mxu0 %v1862
      %v2018 = vpop.f32.mrb[0].mxu0
      %v2019 = vadd.f32 %v1505, %v2018
      %v2020 = vpop.f32.mrb[0].mxu0
      %v2021 = vpop.f32.mrb[0].mxu0
      %v2022 = vadd.f32 %v1505, %v2021
      %v2023 = vpop.f32.mrb[0].mxu0
      %2024 = vdwg.mxu0
      %v2025 = vmax.f32 %v1899, 0.0
      %v2026 = vmax.f32 %v1902, 0.0
      %v2027 = vmax.f32 %v1907, 0.0
      %v2028 = vmax.f32 %v1910, 0.0
      %v2029 = vmax.f32 %v1915, 0.0
      %v2030 = vmax.f32 %v1918, 0.0
      %v2031 = vmax.f32 %v1923, 0.0
      %v2032 = vmax.f32 %v1926, 0.0
      %v2033 = vmax.f32 %v1931, 0.0
      %v2034 = vmax.f32 %v1934, 0.0
      %v2035 = vmax.f32 %v1939, 0.0
      %v2036 = vmax.f32 %v1942, 0.0
      %v2037 = vmax.f32 %v1947, 0.0
      %v2038 = vmax.f32 %v1950, 0.0
      %v2039 = vmax.f32 %v1955, 0.0
      %v2040 = vmax.f32 %v1958, 0.0
      %v2041 = vmax.f32 %v1963, 0.0
      %v2042 = vmax.f32 %v1966, 0.0
      %v2043 = vmax.f32 %v1971, 0.0
      %v2044 = vmax.f32 %v1974, 0.0
      %v2045 = vmax.f32 %v1979, 0.0
      %v2046 = vmax.f32 %v1982, 0.0
      %v2047 = vmax.f32 %v1987, 0.0
      %v2048 = vmax.f32 %v1990, 0.0
      %v2049 = vmax.f32 %v1995, 0.0
      %v2050 = vmax.f32 %v1998, 0.0
      %v2051 = vmax.f32 %v2003, 0.0
      %v2052 = vmax.f32 %v2006, 0.0
      %v2053 = vmax.f32 %v2011, 0.0
      %v2054 = vmax.f32 %v2014, 0.0
      %v2055 = vmax.f32 %v2019, 0.0
      %v2056 = vmax.f32 %v2022, 0.0
      %v2057 = vpack.c.bf16 %v2026, %v2025
      %v2058 = vpack.c.bf16 %v2028, %v2027
      %v2059 = vpack.c.bf16 %v2030, %v2029
      %v2060 = vpack.c.bf16 %v2032, %v2031
      %v2061 = vpack.c.bf16 %v2034, %v2033
      %v2062 = vpack.c.bf16 %v2036, %v2035
      %v2063 = vpack.c.bf16 %v2038, %v2037
      %v2064 = vpack.c.bf16 %v2040, %v2039
      %v2065 = vpack.c.bf16 %v2042, %v2041
      %v2066 = vpack.c.bf16 %v2044, %v2043
      %v2067 = vpack.c.bf16 %v2046, %v2045
      %v2068 = vpack.c.bf16 %v2048, %v2047
      %v2069 = vpack.c.bf16 %v2050, %v2049
      %v2070 = vpack.c.bf16 %v2052, %v2051
      %v2071 = vpack.c.bf16 %v2054, %v2053
      %v2072 = vpack.c.bf16 %v2056, %v2055
      %2073 = vrot.lane.b32.xlu0 %v1483, 120
      %v2074 = vpop.permute.xlu0 %2073
      %2075 = vrot.lane.b32.xlu0 %v1484, 120
      %v2076 = vpop.permute.xlu0 %2075
      %2077 = vrot.lane.b32.xlu0 %v1485, 120
      %v2078 = vpop.permute.xlu0 %2077
      %2079 = vrot.lane.b32.xlu0 %v1486, 120
      %v2080 = vpop.permute.xlu0 %2079
      %2081 = vrot.lane.b32.xlu0 %v1487, 120
      %v2082 = vpop.permute.xlu0 %2081
      %2083 = vrot.lane.b32.xlu0 %v1488, 120
      %v2084 = vpop.permute.xlu0 %2083
      %2085 = vrot.lane.b32.xlu0 %v1489, 120
      %v2086 = vpop.permute.xlu0 %2085
      %2087 = vrot.lane.b32.xlu0 %v1490, 120
      %v2088 = vpop.permute.xlu0 %2087
      %2089 = vrot.lane.b32.xlu0 %v1491, 120
      %v2090 = vpop.permute.xlu0 %2089
      %2091 = vrot.lane.b32.xlu0 %v1492, 120
      %v2092 = vpop.permute.xlu0 %2091
      %2093 = vrot.lane.b32.xlu0 %v1493, 120
      %v2094 = vpop.permute.xlu0 %2093
      %2095 = vrot.lane.b32.xlu0 %v1494, 120
      %v2096 = vpop.permute.xlu0 %2095
      %2097 = vrot.lane.b32.xlu0 %v1495, 120
      %v2098 = vpop.permute.xlu0 %2097
      %2099 = vrot.lane.b32.xlu0 %v1496, 120
      %v2100 = vpop.permute.xlu0 %2099
      %2101 = vrot.lane.b32.xlu0 %v1497, 120
      %v2102 = vpop.permute.xlu0 %2101
      %2103 = vrot.lane.b32.xlu0 %v1498, 120
      %v2104 = vpop.permute.xlu0 %2103
      %v2106 = vsel %vm1144, %v2074, 0
      %v2109 = vsel %vm1144, %v2076, 0
      %v2112 = vsel %vm1144, %v2078, 0
      %v2115 = vsel %vm1144, %v2080, 0
      %v2118 = vsel %vm1144, %v2082, 0
      %v2121 = vsel %vm1144, %v2084, 0
      %v2124 = vsel %vm1144, %v2086, 0
      %v2127 = vsel %vm1144, %v2088, 0
      %v2130 = vsel %vm1144, %v2090, 0
      %v2133 = vsel %vm1144, %v2092, 0
      %v2136 = vsel %vm1144, %v2094, 0
      %v2139 = vsel %vm1144, %v2096, 0
      %v2142 = vsel %vm1144, %v2098, 0
      %v2145 = vsel %vm1144, %v2100, 0
      %v2148 = vsel %vm1144, %v2102, 0
      %v2151 = vsel %vm1144, %v2104, 0
      %2153 = vmatprep.subr.bf16.mxu0 0
      %2154 = vmatpush1.bf16.msra.mxu0 %v1557
      %2155 = vmatprep.subr.bf16.mxu0 0
      %2156 = vmatpush1.bf16.msra.mxu0 0
      %2157 = vmatprep.subr.bf16.mxu0 0
      %2158 = vmatpush1.bf16.msra.mxu0 0
      %2159 = vmatprep.subr.bf16.mxu0 0
      %2160 = vmatpush1.bf16.msra.mxu0 0
      %2161 = vmatprep.subr.bf16.mxu0 0
      %2162 = vmatpush1.bf16.msra.mxu0 0
      %2163 = vmatprep.subr.bf16.mxu0 0
      %2164 = vmatpush1.bf16.msra.mxu0 0
      %2165 = vmatprep.subr.bf16.mxu0 0
      %2166 = vmatpush1.bf16.msra.mxu0 0
      %2167 = vmatprep.subr.bf16.mxu0 0
      %2168 = vmatpush1.bf16.msra.mxu0 0
      %2169 = vmatprep.subr.bf16.mxu0 0
      %2170 = vmatpush1.bf16.msra.mxu0 0
      %2171 = vmatprep.subr.bf16.mxu0 0
      %2172 = vmatpush1.bf16.msra.mxu0 0
      %2173 = vmatprep.subr.bf16.mxu0 0
      %2174 = vmatpush1.bf16.msra.mxu0 0
      %2175 = vmatprep.subr.bf16.mxu0 0
      %2176 = vmatpush1.bf16.msra.mxu0 0
      %2177 = vmatprep.subr.bf16.mxu0 0
      %2178 = vmatpush1.bf16.msra.mxu0 0
      %2179 = vmatprep.subr.bf16.mxu0 0
      %2180 = vmatpush1.bf16.msra.mxu0 0
      %2181 = vmatprep.subr.bf16.mxu0 0
      %2182 = vmatpush1.bf16.msra.mxu0 0
      %2183 = vmatprep.subr.bf16.mxu0 0
      %2184 = vmatpush1.bf16.msra.mxu0 0
      %2185 = vmatprep.mubr.bf16.mxu0 0
      %2186 = vmatmul.mubr.bf16.gmra.mrb[0].mxu0 %v2106
      %v2187 = vpop.f32.mrb[0].mxu0
      %v2188 = vadd.f32 %v1505, %v2187
      %v2189 = vpop.f32.mrb[0].mxu0
      %v2190 = vpop.f32.mrb[0].mxu0
      %v2191 = vadd.f32 %v1505, %v2190
      %v2192 = vpop.f32.mrb[0].mxu0
      %2193 = vmatprep.mubr.bf16.mxu0 0
      %2194 = vmatmul.mubr.bf16.gmra.mrb[0].mxu0 %v2109
      %v2195 = vpop.f32.mrb[0].mxu0
      %v2196 = vadd.f32 %v1505, %v2195
      %v2197 = vpop.f32.mrb[0].mxu0
      %v2198 = vpop.f32.mrb[0].mxu0
      %v2199 = vadd.f32 %v1505, %v2198
      %v2200 = vpop.f32.mrb[0].mxu0
      %2201 = vmatprep.mubr.bf16.mxu0 0
      %2202 = vmatmul.mubr.bf16.gmra.mrb[0].mxu0 %v2112
      %v2203 = vpop.f32.mrb[0].mxu0
      %v2204 = vadd.f32 %v1505, %v2203
      %v2205 = vpop.f32.mrb[0].mxu0
      %v2206 = vpop.f32.mrb[0].mxu0
      %v2207 = vadd.f32 %v1505, %v2206
      %v2208 = vpop.f32.mrb[0].mxu0
      %2209 = vmatprep.mubr.bf16.mxu0 0
      %2210 = vmatmul.mubr.bf16.gmra.mrb[0].mxu0 %v2115
      %v2211 = vpop.f32.mrb[0].mxu0
      %v2212 = vadd.f32 %v1505, %v2211
      %v2213 = vpop.f32.mrb[0].mxu0
      %v2214 = vpop.f32.mrb[0].mxu0
      %v2215 = vadd.f32 %v1505, %v2214
      %v2216 = vpop.f32.mrb[0].mxu0
      %2217 = vmatprep.mubr.bf16.mxu0 0
      %2218 = vmatmul.mubr.bf16.gmra.mrb[0].mxu0 %v2118
      %v2219 = vpop.f32.mrb[0].mxu0
      %v2220 = vadd.f32 %v1505, %v2219
      %v2221 = vpop.f32.mrb[0].mxu0
      %v2222 = vpop.f32.mrb[0].mxu0
      %v2223 = vadd.f32 %v1505, %v2222
      %v2224 = vpop.f32.mrb[0].mxu0
      %2225 = vmatprep.mubr.bf16.mxu0 0
      %2226 = vmatmul.mubr.bf16.gmra.mrb[0].mxu0 %v2121
      %v2227 = vpop.f32.mrb[0].mxu0
      %v2228 = vadd.f32 %v1505, %v2227
      %v2229 = vpop.f32.mrb[0].mxu0
      %v2230 = vpop.f32.mrb[0].mxu0
      %v2231 = vadd.f32 %v1505, %v2230
      %v2232 = vpop.f32.mrb[0].mxu0
      %2233 = vmatprep.mubr.bf16.mxu0 0
      %2234 = vmatmul.mubr.bf16.gmra.mrb[0].mxu0 %v2124
      %v2235 = vpop.f32.mrb[0].mxu0
      %v2236 = vadd.f32 %v1505, %v2235
      %v2237 = vpop.f32.mrb[0].mxu0
      %v2238 = vpop.f32.mrb[0].mxu0
      %v2239 = vadd.f32 %v1505, %v2238
      %v2240 = vpop.f32.mrb[0].mxu0
      %2241 = vmatprep.mubr.bf16.mxu0 0
      %2242 = vmatmul.mubr.bf16.gmra.mrb[0].mxu0 %v2127
      %v2243 = vpop.f32.mrb[0].mxu0
      %v2244 = vadd.f32 %v1505, %v2243
      %v2245 = vpop.f32.mrb[0].mxu0
      %v2246 = vpop.f32.mrb[0].mxu0
      %v2247 = vadd.f32 %v1505, %v2246
      %v2248 = vpop.f32.mrb[0].mxu0
      %2249 = vmatprep.mubr.bf16.mxu0 0
      %2250 = vmatmul.mubr.bf16.gmra.mrb[0].mxu0 %v2130
      %v2251 = vpop.f32.mrb[0].mxu0
      %v2252 = vadd.f32 %v1505, %v2251
      %v2253 = vpop.f32.mrb[0].mxu0
      %v2254 = vpop.f32.mrb[0].mxu0
      %v2255 = vadd.f32 %v1505, %v2254
      %v2256 = vpop.f32.mrb[0].mxu0
      %2257 = vmatprep.mubr.bf16.mxu0 0
      %2258 = vmatmul.mubr.bf16.gmra.mrb[0].mxu0 %v2133
      %v2259 = vpop.f32.mrb[0].mxu0
      %v2260 = vadd.f32 %v1505, %v2259
      %v2261 = vpop.f32.mrb[0].mxu0
      %v2262 = vpop.f32.mrb[0].mxu0
      %v2263 = vadd.f32 %v1505, %v2262
      %v2264 = vpop.f32.mrb[0].mxu0
      %2265 = vmatprep.mubr.bf16.mxu0 0
      %2266 = vmatmul.mubr.bf16.gmra.mrb[0].mxu0 %v2136
      %v2267 = vpop.f32.mrb[0].mxu0
      %v2268 = vadd.f32 %v1505, %v2267
      %v2269 = vpop.f32.mrb[0].mxu0
      %v2270 = vpop.f32.mrb[0].mxu0
      %v2271 = vadd.f32 %v1505, %v2270
      %v2272 = vpop.f32.mrb[0].mxu0
      %2273 = vmatprep.mubr.bf16.mxu0 0
      %2274 = vmatmul.mubr.bf16.gmra.mrb[0].mxu0 %v2139
      %v2275 = vpop.f32.mrb[0].mxu0
      %v2276 = vadd.f32 %v1505, %v2275
      %v2277 = vpop.f32.mrb[0].mxu0
      %v2278 = vpop.f32.mrb[0].mxu0
      %v2279 = vadd.f32 %v1505, %v2278
      %v2280 = vpop.f32.mrb[0].mxu0
      %2281 = vmatprep.mubr.bf16.mxu0 0
      %2282 = vmatmul.mubr.bf16.gmra.mrb[0].mxu0 %v2142
      %v2283 = vpop.f32.mrb[0].mxu0
      %v2284 = vadd.f32 %v1505, %v2283
      %v2285 = vpop.f32.mrb[0].mxu0
      %v2286 = vpop.f32.mrb[0].mxu0
      %v2287 = vadd.f32 %v1505, %v2286
      %v2288 = vpop.f32.mrb[0].mxu0
      %2289 = vmatprep.mubr.bf16.mxu0 0
      %2290 = vmatmul.mubr.bf16.gmra.mrb[0].mxu0 %v2145
      %v2291 = vpop.f32.mrb[0].mxu0
      %v2292 = vadd.f32 %v1505, %v2291
      %v2293 = vpop.f32.mrb[0].mxu0
      %v2294 = vpop.f32.mrb[0].mxu0
      %v2295 = vadd.f32 %v1505, %v2294
      %v2296 = vpop.f32.mrb[0].mxu0
      %2297 = vmatprep.mubr.bf16.mxu0 0
      %2298 = vmatmul.mubr.bf16.gmra.mrb[0].mxu0 %v2148
      %v2299 = vpop.f32.mrb[0].mxu0
      %v2300 = vadd.f32 %v1505, %v2299
      %v2301 = vpop.f32.mrb[0].mxu0
      %v2302 = vpop.f32.mrb[0].mxu0
      %v2303 = vadd.f32 %v1505, %v2302
      %v2304 = vpop.f32.mrb[0].mxu0
      %2305 = vmatprep.mubr.bf16.mxu0 0
      %2306 = vmatmul.mubr.bf16.gmra.mrb[0].mxu0 %v2151
      %v2307 = vpop.f32.mrb[0].mxu0
      %v2308 = vadd.f32 %v1505, %v2307
      %v2309 = vpop.f32.mrb[0].mxu0
      %v2310 = vpop.f32.mrb[0].mxu0
      %v2311 = vadd.f32 %v1505, %v2310
      %v2312 = vpop.f32.mrb[0].mxu0
      %2313 = vdwg.mxu0
      %v2314 = vmax.f32 %v2188, 0.0
      %v2315 = vmax.f32 %v2191, 0.0
      %v2316 = vmax.f32 %v2196, 0.0
      %v2317 = vmax.f32 %v2199, 0.0
      %v2318 = vmax.f32 %v2204, 0.0
      %v2319 = vmax.f32 %v2207, 0.0
      %v2320 = vmax.f32 %v2212, 0.0
      %v2321 = vmax.f32 %v2215, 0.0
      %v2322 = vmax.f32 %v2220, 0.0
      %v2323 = vmax.f32 %v2223, 0.0
      %v2324 = vmax.f32 %v2228, 0.0
      %v2325 = vmax.f32 %v2231, 0.0
      %v2326 = vmax.f32 %v2236, 0.0
      %v2327 = vmax.f32 %v2239, 0.0
      %v2328 = vmax.f32 %v2244, 0.0
      %v2329 = vmax.f32 %v2247, 0.0
      %v2330 = vmax.f32 %v2252, 0.0
      %v2331 = vmax.f32 %v2255, 0.0
      %v2332 = vmax.f32 %v2260, 0.0
      %v2333 = vmax.f32 %v2263, 0.0
      %v2334 = vmax.f32 %v2268, 0.0
      %v2335 = vmax.f32 %v2271, 0.0
      %v2336 = vmax.f32 %v2276, 0.0
      %v2337 = vmax.f32 %v2279, 0.0
      %v2338 = vmax.f32 %v2284, 0.0
      %v2339 = vmax.f32 %v2287, 0.0
      %v2340 = vmax.f32 %v2292, 0.0
      %v2341 = vmax.f32 %v2295, 0.0
      %v2342 = vmax.f32 %v2300, 0.0
      %v2343 = vmax.f32 %v2303, 0.0
      %v2344 = vmax.f32 %v2308, 0.0
      %v2345 = vmax.f32 %v2311, 0.0
      %v2346 = vpack.c.bf16 %v2315, %v2314
      %v2347 = vpack.c.bf16 %v2317, %v2316
      %v2348 = vpack.c.bf16 %v2319, %v2318
      %v2349 = vpack.c.bf16 %v2321, %v2320
      %v2350 = vpack.c.bf16 %v2323, %v2322
      %v2351 = vpack.c.bf16 %v2325, %v2324
      %v2352 = vpack.c.bf16 %v2327, %v2326
      %v2353 = vpack.c.bf16 %v2329, %v2328
      %v2354 = vpack.c.bf16 %v2331, %v2330
      %v2355 = vpack.c.bf16 %v2333, %v2332
      %v2356 = vpack.c.bf16 %v2335, %v2334
      %v2357 = vpack.c.bf16 %v2337, %v2336
      %v2358 = vpack.c.bf16 %v2339, %v2338
      %v2359 = vpack.c.bf16 %v2341, %v2340
      %v2360 = vpack.c.bf16 %v2343, %v2342
      %v2361 = vpack.c.bf16 %v2345, %v2344
      %2362 = vrot.lane.b32.xlu0 %v1483, 116
      %v2363 = vpop.permute.xlu0 %2362
      %2364 = vrot.lane.b32.xlu0 %v1484, 116
      %v2365 = vpop.permute.xlu0 %2364
      %2366 = vrot.lane.b32.xlu0 %v1485, 116
      %v2367 = vpop.permute.xlu0 %2366
      %2368 = vrot.lane.b32.xlu0 %v1486, 116
      %v2369 = vpop.permute.xlu0 %2368
      %2370 = vrot.lane.b32.xlu0 %v1487, 116
      %v2371 = vpop.permute.xlu0 %2370
      %2372 = vrot.lane.b32.xlu0 %v1488, 116
      %v2373 = vpop.permute.xlu0 %2372
      %2374 = vrot.lane.b32.xlu0 %v1489, 116
      %v2375 = vpop.permute.xlu0 %2374
      %2376 = vrot.lane.b32.xlu0 %v1490, 116
      %v2377 = vpop.permute.xlu0 %2376
      %2378 = vrot.lane.b32.xlu0 %v1491, 116
      %v2379 = vpop.permute.xlu0 %2378
      %2380 = vrot.lane.b32.xlu0 %v1492, 116
      %v2381 = vpop.permute.xlu0 %2380
      %2382 = vrot.lane.b32.xlu0 %v1493, 116
      %v2383 = vpop.permute.xlu0 %2382
      %2384 = vrot.lane.b32.xlu0 %v1494, 116
      %v2385 = vpop.permute.xlu0 %2384
      %2386 = vrot.lane.b32.xlu0 %v1495, 116
      %v2387 = vpop.permute.xlu0 %2386
      %2388 = vrot.lane.b32.xlu0 %v1496, 116
      %v2389 = vpop.permute.xlu0 %2388
      %2390 = vrot.lane.b32.xlu0 %v1497, 116
      %v2391 = vpop.permute.xlu0 %2390
      %2392 = vrot.lane.b32.xlu0 %v1498, 116
      %v2393 = vpop.permute.xlu0 %2392
      %v2395 = vsel %vm1144, %v2363, 0
      %v2398 = vsel %vm1144, %v2365, 0
      %v2401 = vsel %vm1144, %v2367, 0
      %v2404 = vsel %vm1144, %v2369, 0
      %v2407 = vsel %vm1144, %v2371, 0
      %v2410 = vsel %vm1144, %v2373, 0
      %v2413 = vsel %vm1144, %v2375, 0
      %v2416 = vsel %vm1144, %v2377, 0
      %v2419 = vsel %vm1144, %v2379, 0
      %v2422 = vsel %vm1144, %v2381, 0
      %v2425 = vsel %vm1144, %v2383, 0
      %v2428 = vsel %vm1144, %v2385, 0
      %v2431 = vsel %vm1144, %v2387, 0
      %v2434 = vsel %vm1144, %v2389, 0
      %v2437 = vsel %vm1144, %v2391, 0
      %v2440 = vsel %vm1144, %v2393, 0
      %2442 = vmatprep.subr.bf16.mxu0 0
      %2443 = vmatpush1.bf16.msra.mxu0 %v1557
      %2444 = vmatprep.subr.bf16.mxu0 0
      %2445 = vmatpush1.bf16.msra.mxu0 0
      %2446 = vmatprep.subr.bf16.mxu0 0
      %2447 = vmatpush1.bf16.msra.mxu0 0
      %2448 = vmatprep.subr.bf16.mxu0 0
      %2449 = vmatpush1.bf16.msra.mxu0 0
      %2450 = vmatprep.subr.bf16.mxu0 0
      %2451 = vmatpush1.bf16.msra.mxu0 0
      %2452 = vmatprep.subr.bf16.mxu0 0
      %2453 = vmatpush1.bf16.msra.mxu0 0
      %2454 = vmatprep.subr.bf16.mxu0 0
      %2455 = vmatpush1.bf16.msra.mxu0 0
      %2456 = vmatprep.subr.bf16.mxu0 0
      %2457 = vmatpush1.bf16.msra.mxu0 0
      %2458 = vmatprep.subr.bf16.mxu0 0
      %2459 = vmatpush1.bf16.msra.mxu0 0
      %2460 = vmatprep.subr.bf16.mxu0 0
      %2461 = vmatpush1.bf16.msra.mxu0 0
      %2462 = vmatprep.subr.bf16.mxu0 0
      %2463 = vmatpush1.bf16.msra.mxu0 0
      %2464 = vmatprep.subr.bf16.mxu0 0
      %2465 = vmatpush1.bf16.msra.mxu0 0
      %2466 = vmatprep.subr.bf16.mxu0 0
      %2467 = vmatpush1.bf16.msra.mxu0 0
      %2468 = vmatprep.subr.bf16.mxu0 0
      %2469 = vmatpush1.bf16.msra.mxu0 0
      %2470 = vmatprep.subr.bf16.mxu0 0
      %2471 = vmatpush1.bf16.msra.mxu0 0
      %2472 = vmatprep.subr.bf16.mxu0 0
      %2473 = vmatpush1.bf16.msra.mxu0 0
      %2474 = vmatprep.mubr.bf16.mxu0 0
      %2475 = vmatmul.mubr.bf16.gmra.mrb[0].mxu0 %v2395
      %v2476 = vpop.f32.mrb[0].mxu0
      %v2477 = vadd.f32 %v1505, %v2476
      %v2478 = vpop.f32.mrb[0].mxu0
      %v2479 = vpop.f32.mrb[0].mxu0
      %v2480 = vadd.f32 %v1505, %v2479
      %v2481 = vpop.f32.mrb[0].mxu0
      %2482 = vmatprep.mubr.bf16.mxu0 0
      %2483 = vmatmul.mubr.bf16.gmra.mrb[0].mxu0 %v2398
      %v2484 = vpop.f32.mrb[0].mxu0
      %v2485 = vadd.f32 %v1505, %v2484
      %v2486 = vpop.f32.mrb[0].mxu0
      %v2487 = vpop.f32.mrb[0].mxu0
      %v2488 = vadd.f32 %v1505, %v2487
      %v2489 = vpop.f32.mrb[0].mxu0
      %2490 = vmatprep.mubr.bf16.mxu0 0
      %2491 = vmatmul.mubr.bf16.gmra.mrb[0].mxu0 %v2401
      %v2492 = vpop.f32.mrb[0].mxu0
      %v2493 = vadd.f32 %v1505, %v2492
      %v2494 = vpop.f32.mrb[0].mxu0
      %v2495 = vpop.f32.mrb[0].mxu0
      %v2496 = vadd.f32 %v1505, %v2495
      %v2497 = vpop.f32.mrb[0].mxu0
      %2498 = vmatprep.mubr.bf16.mxu0 0
      %2499 = vmatmul.mubr.bf16.gmra.mrb[0].mxu0 %v2404
      %v2500 = vpop.f32.mrb[0].mxu0
      %v2501 = vadd.f32 %v1505, %v2500
      %v2502 = vpop.f32.mrb[0].mxu0
      %v2503 = vpop.f32.mrb[0].mxu0
      %v2504 = vadd.f32 %v1505, %v2503
      %v2505 = vpop.f32.mrb[0].mxu0
      %2506 = vmatprep.mubr.bf16.mxu0 0
      %2507 = vmatmul.mubr.bf16.gmra.mrb[0].mxu0 %v2407
      %v2508 = vpop.f32.mrb[0].mxu0
      %v2509 = vadd.f32 %v1505, %v2508
      %v2510 = vpop.f32.mrb[0].mxu0
      %v2511 = vpop.f32.mrb[0].mxu0
      %v2512 = vadd.f32 %v1505, %v2511
      %v2513 = vpop.f32.mrb[0].mxu0
      %2514 = vmatprep.mubr.bf16.mxu0 0
      %2515 = vmatmul.mubr.bf16.gmra.mrb[0].mxu0 %v2410
      %v2516 = vpop.f32.mrb[0].mxu0
      %v2517 = vadd.f32 %v1505, %v2516
      %v2518 = vpop.f32.mrb[0].mxu0
      %v2519 = vpop.f32.mrb[0].mxu0
      %v2520 = vadd.f32 %v1505, %v2519
      %v2521 = vpop.f32.mrb[0].mxu0
      %2522 = vmatprep.mubr.bf16.mxu0 0
      %2523 = vmatmul.mubr.bf16.gmra.mrb[0].mxu0 %v2413
      %v2524 = vpop.f32.mrb[0].mxu0
      %v2525 = vadd.f32 %v1505, %v2524
      %v2526 = vpop.f32.mrb[0].mxu0
      %v2527 = vpop.f32.mrb[0].mxu0
      %v2528 = vadd.f32 %v1505, %v2527
      %v2529 = vpop.f32.mrb[0].mxu0
      %2530 = vmatprep.mubr.bf16.mxu0 0
      %2531 = vmatmul.mubr.bf16.gmra.mrb[0].mxu0 %v2416
      %v2532 = vpop.f32.mrb[0].mxu0
      %v2533 = vadd.f32 %v1505, %v2532
      %v2534 = vpop.f32.mrb[0].mxu0
      %v2535 = vpop.f32.mrb[0].mxu0
      %v2536 = vadd.f32 %v1505, %v2535
      %v2537 = vpop.f32.mrb[0].mxu0
      %2538 = vmatprep.mubr.bf16.mxu0 0
      %2539 = vmatmul.mubr.bf16.gmra.mrb[0].mxu0 %v2419
      %v2540 = vpop.f32.mrb[0].mxu0
      %v2541 = vadd.f32 %v1505, %v2540
      %v2542 = vpop.f32.mrb[0].mxu0
      %v2543 = vpop.f32.mrb[0].mxu0
      %v2544 = vadd.f32 %v1505, %v2543
      %v2545 = vpop.f32.mrb[0].mxu0
      %2546 = vmatprep.mubr.bf16.mxu0 0
      %2547 = vmatmul.mubr.bf16.gmra.mrb[0].mxu0 %v2422
      %v2548 = vpop.f32.mrb[0].mxu0
      %v2549 = vadd.f32 %v1505, %v2548
      %v2550 = vpop.f32.mrb[0].mxu0
      %v2551 = vpop.f32.mrb[0].mxu0
      %v2552 = vadd.f32 %v1505, %v2551
      %v2553 = vpop.f32.mrb[0].mxu0
      %2554 = vmatprep.mubr.bf16.mxu0 0
      %2555 = vmatmul.mubr.bf16.gmra.mrb[0].mxu0 %v2425
      %v2556 = vpop.f32.mrb[0].mxu0
      %v2557 = vadd.f32 %v1505, %v2556
      %v2558 = vpop.f32.mrb[0].mxu0
      %v2559 = vpop.f32.mrb[0].mxu0
      %v2560 = vadd.f32 %v1505, %v2559
      %v2561 = vpop.f32.mrb[0].mxu0
      %2562 = vmatprep.mubr.bf16.mxu0 0
      %2563 = vmatmul.mubr.bf16.gmra.mrb[0].mxu0 %v2428
      %v2564 = vpop.f32.mrb[0].mxu0
      %v2565 = vadd.f32 %v1505, %v2564
      %v2566 = vpop.f32.mrb[0].mxu0
      %v2567 = vpop.f32.mrb[0].mxu0
      %v2568 = vadd.f32 %v1505, %v2567
      %v2569 = vpop.f32.mrb[0].mxu0
      %2570 = vmatprep.mubr.bf16.mxu0 0
      %2571 = vmatmul.mubr.bf16.gmra.mrb[0].mxu0 %v2431
      %v2572 = vpop.f32.mrb[0].mxu0
      %v2573 = vadd.f32 %v1505, %v2572
      %v2574 = vpop.f32.mrb[0].mxu0
      %v2575 = vpop.f32.mrb[0].mxu0
      %v2576 = vadd.f32 %v1505, %v2575
      %v2577 = vpop.f32.mrb[0].mxu0
      %2578 = vmatprep.mubr.bf16.mxu0 0
      %2579 = vmatmul.mubr.bf16.gmra.mrb[0].mxu0 %v2434
      %v2580 = vpop.f32.mrb[0].mxu0
      %v2581 = vadd.f32 %v1505, %v2580
      %v2582 = vpop.f32.mrb[0].mxu0
      %v2583 = vpop.f32.mrb[0].mxu0
      %v2584 = vadd.f32 %v1505, %v2583
      %v2585 = vpop.f32.mrb[0].mxu0
      %2586 = vmatprep.mubr.bf16.mxu0 0
      %2587 = vmatmul.mubr.bf16.gmra.mrb[0].mxu0 %v2437
      %v2588 = vpop.f32.mrb[0].mxu0
      %v2589 = vadd.f32 %v1505, %v2588
      %v2590 = vpop.f32.mrb[0].mxu0
      %v2591 = vpop.f32.mrb[0].mxu0
      %v2592 = vadd.f32 %v1505, %v2591
      %v2593 = vpop.f32.mrb[0].mxu0
      %2594 = vmatprep.mubr.bf16.mxu0 0
      %2595 = vmatmul.mubr.bf16.gmra.mrb[0].mxu0 %v2440
      %v2596 = vpop.f32.mrb[0].mxu0
      %v2597 = vadd.f32 %v1505, %v2596
      %v2598 = vpop.f32.mrb[0].mxu0
      %v2599 = vpop.f32.mrb[0].mxu0
      %v2600 = vadd.f32 %v1505, %v2599
      %v2601 = vpop.f32.mrb[0].mxu0
      %2602 = vdwg.mxu0
      %v2603 = vmax.f32 %v2477, 0.0
      %v2604 = vmax.f32 %v2480, 0.0
      %v2605 = vmax.f32 %v2485, 0.0
      %v2606 = vmax.f32 %v2488, 0.0
      %v2607 = vmax.f32 %v2493, 0.0
      %v2608 = vmax.f32 %v2496, 0.0
      %v2609 = vmax.f32 %v2501, 0.0
      %v2610 = vmax.f32 %v2504, 0.0
      %v2611 = vmax.f32 %v2509, 0.0
      %v2612 = vmax.f32 %v2512, 0.0
      %v2613 = vmax.f32 %v2517, 0.0
      %v2614 = vmax.f32 %v2520, 0.0
      %v2615 = vmax.f32 %v2525, 0.0
      %v2616 = vmax.f32 %v2528, 0.0
      %v2617 = vmax.f32 %v2533, 0.0
      %v2618 = vmax.f32 %v2536, 0.0
      %v2619 = vmax.f32 %v2541, 0.0
      %v2620 = vmax.f32 %v2544, 0.0
      %v2621 = vmax.f32 %v2549, 0.0
      %v2622 = vmax.f32 %v2552, 0.0
      %v2623 = vmax.f32 %v2557, 0.0
      %v2624 = vmax.f32 %v2560, 0.0
      %v2625 = vmax.f32 %v2565, 0.0
      %v2626 = vmax.f32 %v2568, 0.0
      %v2627 = vmax.f32 %v2573, 0.0
      %v2628 = vmax.f32 %v2576, 0.0
      %v2629 = vmax.f32 %v2581, 0.0
      %v2630 = vmax.f32 %v2584, 0.0
      %v2631 = vmax.f32 %v2589, 0.0
      %v2632 = vmax.f32 %v2592, 0.0
      %v2633 = vmax.f32 %v2597, 0.0
      %v2634 = vmax.f32 %v2600, 0.0
      %v2635 = vpack.c.bf16 %v2604, %v2603
      %v2636 = vpack.c.bf16 %v2606, %v2605
      %v2637 = vpack.c.bf16 %v2608, %v2607
      %v2638 = vpack.c.bf16 %v2610, %v2609
      %v2639 = vpack.c.bf16 %v2612, %v2611
      %v2640 = vpack.c.bf16 %v2614, %v2613
      %v2641 = vpack.c.bf16 %v2616, %v2615
      %v2642 = vpack.c.bf16 %v2618, %v2617
      %v2643 = vpack.c.bf16 %v2620, %v2619
      %v2644 = vpack.c.bf16 %v2622, %v2621
      %v2645 = vpack.c.bf16 %v2624, %v2623
      %v2646 = vpack.c.bf16 %v2626, %v2625
      %v2647 = vpack.c.bf16 %v2628, %v2627
      %v2648 = vpack.c.bf16 %v2630, %v2629
      %v2649 = vpack.c.bf16 %v2632, %v2631
      %v2650 = vpack.c.bf16 %v2634, %v2633
      %2667 = vrot.lane.b32.xlu0 %v2057, 8
      %v2668 = vpop.permute.xlu0 %2667
      %2669 = vrot.lane.b32.xlu0 %v2058, 8
      %v2670 = vpop.permute.xlu0 %2669
      %2671 = vrot.lane.b32.xlu0 %v2059, 8
      %v2672 = vpop.permute.xlu0 %2671
      %2673 = vrot.lane.b32.xlu0 %v2060, 8
      %v2674 = vpop.permute.xlu0 %2673
      %2675 = vrot.lane.b32.xlu0 %v2061, 8
      %v2676 = vpop.permute.xlu0 %2675
      %2677 = vrot.lane.b32.xlu0 %v2062, 8
      %v2678 = vpop.permute.xlu0 %2677
      %2679 = vrot.lane.b32.xlu0 %v2063, 8
      %v2680 = vpop.permute.xlu0 %2679
      %2681 = vrot.lane.b32.xlu0 %v2064, 8
      %v2682 = vpop.permute.xlu0 %2681
      %2683 = vrot.lane.b32.xlu0 %v2065, 8
      %v2684 = vpop.permute.xlu0 %2683
      %2685 = vrot.lane.b32.xlu0 %v2066, 8
      %v2686 = vpop.permute.xlu0 %2685
      %2687 = vrot.lane.b32.xlu0 %v2067, 8
      %v2688 = vpop.permute.xlu0 %2687
      %2689 = vrot.lane.b32.xlu0 %v2068, 8
      %v2690 = vpop.permute.xlu0 %2689
      %2691 = vrot.lane.b32.xlu0 %v2069, 8
      %v2692 = vpop.permute.xlu0 %2691
      %2693 = vrot.lane.b32.xlu0 %v2070, 8
      %v2694 = vpop.permute.xlu0 %2693
      %2695 = vrot.lane.b32.xlu0 %v2071, 8
      %v2696 = vpop.permute.xlu0 %2695
      %2697 = vrot.lane.b32.xlu0 %v2072, 8
      %v2698 = vpop.permute.xlu0 %2697
      %v2701 = vsel %vm1177, %v1752, %v2668
      %v2704 = vsel %vm1177, %v1753, %v2670
      %v2707 = vsel %vm1177, %v1754, %v2672
      %v2710 = vsel %vm1177, %v1755, %v2674
      %v2713 = vsel %vm1177, %v1756, %v2676
      %v2716 = vsel %vm1177, %v1757, %v2678
      %v2719 = vsel %vm1177, %v1758, %v2680
      %v2722 = vsel %vm1177, %v1759, %v2682
      %v2725 = vsel %vm1177, %v1760, %v2684
      %v2728 = vsel %vm1177, %v1761, %v2686
      %v2731 = vsel %vm1177, %v1762, %v2688
      %v2734 = vsel %vm1177, %v1763, %v2690
      %v2737 = vsel %vm1177, %v1764, %v2692
      %v2740 = vsel %vm1177, %v1765, %v2694
      %v2743 = vsel %vm1177, %v1766, %v2696
      %v2746 = vsel %vm1177, %v1767, %v2698
      %2763 = vrot.lane.b32.xlu0 %v2635, 8
      %v2764 = vpop.permute.xlu0 %2763
      %2765 = vrot.lane.b32.xlu0 %v2636, 8
      %v2766 = vpop.permute.xlu0 %2765
      %2767 = vrot.lane.b32.xlu0 %v2637, 8
      %v2768 = vpop.permute.xlu0 %2767
      %2769 = vrot.lane.b32.xlu0 %v2638, 8
      %v2770 = vpop.permute.xlu0 %2769
      %2771 = vrot.lane.b32.xlu0 %v2639, 8
      %v2772 = vpop.permute.xlu0 %2771
      %2773 = vrot.lane.b32.xlu0 %v2640, 8
      %v2774 = vpop.permute.xlu0 %2773
      %2775 = vrot.lane.b32.xlu0 %v2641, 8
      %v2776 = vpop.permute.xlu0 %2775
      %2777 = vrot.lane.b32.xlu0 %v2642, 8
      %v2778 = vpop.permute.xlu0 %2777
      %2779 = vrot.lane.b32.xlu0 %v2643, 8
      %v2780 = vpop.permute.xlu0 %2779
      %2781 = vrot.lane.b32.xlu0 %v2644, 8
      %v2782 = vpop.permute.xlu0 %2781
      %2783 = vrot.lane.b32.xlu0 %v2645, 8
      %v2784 = vpop.permute.xlu0 %2783
      %2785 = vrot.lane.b32.xlu0 %v2646, 8
      %v2786 = vpop.permute.xlu0 %2785
      %2787 = vrot.lane.b32.xlu0 %v2647, 8
      %v2788 = vpop.permute.xlu0 %2787
      %2789 = vrot.lane.b32.xlu0 %v2648, 8
      %v2790 = vpop.permute.xlu0 %2789
      %2791 = vrot.lane.b32.xlu0 %v2649, 8
      %v2792 = vpop.permute.xlu0 %2791
      %2793 = vrot.lane.b32.xlu0 %v2650, 8
      %v2794 = vpop.permute.xlu0 %2793
      %v2797 = vsel %vm1177, %v2346, %v2764
      %v2800 = vsel %vm1177, %v2347, %v2766
      %v2803 = vsel %vm1177, %v2348, %v2768
      %v2806 = vsel %vm1177, %v2349, %v2770
      %v2809 = vsel %vm1177, %v2350, %v2772
      %v2812 = vsel %vm1177, %v2351, %v2774
      %v2815 = vsel %vm1177, %v2352, %v2776
      %v2818 = vsel %vm1177, %v2353, %v2778
      %v2821 = vsel %vm1177, %v2354, %v2780
      %v2824 = vsel %vm1177, %v2355, %v2782
      %v2827 = vsel %vm1177, %v2356, %v2784
      %v2830 = vsel %vm1177, %v2357, %v2786
      %v2833 = vsel %vm1177, %v2358, %v2788
      %v2836 = vsel %vm1177, %v2359, %v2790
      %v2839 = vsel %vm1177, %v2360, %v2792
      %v2842 = vsel %vm1177, %v2361, %v2794
      %v2875 = vunpack.c.l.b16 %v2701
      %v2876 = vunpack.c.h.b16 %v2701
      %v2877 = vunpack.c.l.b16 %v2797
      %v2878 = vunpack.c.h.b16 %v2797
      %v2879 = vunpack.c.l.b16 %v2704
      %v2880 = vunpack.c.h.b16 %v2704
      %v2881 = vunpack.c.l.b16 %v2800
      %v2882 = vunpack.c.h.b16 %v2800
      %v2883 = vunpack.c.l.b16 %v2707
      %v2884 = vunpack.c.h.b16 %v2707
      %v2885 = vunpack.c.l.b16 %v2803
      %v2886 = vunpack.c.h.b16 %v2803
      %v2887 = vunpack.c.l.b16 %v2710
      %v2888 = vunpack.c.h.b16 %v2710
      %v2889 = vunpack.c.l.b16 %v2806
      %v2890 = vunpack.c.h.b16 %v2806
      %v2891 = vunpack.c.l.b16 %v2713
      %v2892 = vunpack.c.h.b16 %v2713
      %v2893 = vunpack.c.l.b16 %v2809
      %v2894 = vunpack.c.h.b16 %v2809
      %v2895 = vunpack.c.l.b16 %v2716
      %v2896 = vunpack.c.h.b16 %v2716
      %v2897 = vunpack.c.l.b16 %v2812
      %v2898 = vunpack.c.h.b16 %v2812
      %v2899 = vunpack.c.l.b16 %v2719
      %v2900 = vunpack.c.h.b16 %v2719
      %v2901 = vunpack.c.l.b16 %v2815
      %v2902 = vunpack.c.h.b16 %v2815
      %v2903 = vunpack.c.l.b16 %v2722
      %v2904 = vunpack.c.h.b16 %v2722
      %v2905 = vunpack.c.l.b16 %v2818
      %v2906 = vunpack.c.h.b16 %v2818
      %v2907 = vunpack.c.l.b16 %v2725
      %v2908 = vunpack.c.h.b16 %v2725
      %v2909 = vunpack.c.l.b16 %v2821
      %v2910 = vunpack.c.h.b16 %v2821
      %v2911 = vunpack.c.l.b16 %v2728
      %v2912 = vunpack.c.h.b16 %v2728
      %v2913 = vunpack.c.l.b16 %v2824
      %v2914 = vunpack.c.h.b16 %v2824
      %v2915 = vunpack.c.l.b16 %v2731
      %v2916 = vunpack.c.h.b16 %v2731
      %v2917 = vunpack.c.l.b16 %v2827
      %v2918 = vunpack.c.h.b16 %v2827
      %v2919 = vunpack.c.l.b16 %v2734
      %v2920 = vunpack.c.h.b16 %v2734
      %v2921 = vunpack.c.l.b16 %v2830
      %v2922 = vunpack.c.h.b16 %v2830
      %v2923 = vunpack.c.l.b16 %v2737
      %v2924 = vunpack.c.h.b16 %v2737
      %v2925 = vunpack.c.l.b16 %v2833
      %v2926 = vunpack.c.h.b16 %v2833
      %v2927 = vunpack.c.l.b16 %v2740
      %v2928 = vunpack.c.h.b16 %v2740
      %v2929 = vunpack.c.l.b16 %v2836
      %v2930 = vunpack.c.h.b16 %v2836
      %v2931 = vunpack.c.l.b16 %v2743
      %v2932 = vunpack.c.h.b16 %v2743
      %v2933 = vunpack.c.l.b16 %v2839
      %v2934 = vunpack.c.h.b16 %v2839
      %v2935 = vunpack.c.l.b16 %v2746
      %v2936 = vunpack.c.h.b16 %v2746
      %v2937 = vunpack.c.l.b16 %v2842
      %v2938 = vunpack.c.h.b16 %v2842
      %v2939 = vpack.c.b16 %v2875, %v2875
      %v2940 = vpack.c.b16 %v2876, %v2876
      %v2941 = vpack.c.b16 %v2877, %v2877
      %v2942 = vpack.c.b16 %v2878, %v2878
      %v2943 = vpack.c.b16 %v2879, %v2879
      %v2944 = vpack.c.b16 %v2880, %v2880
      %v2945 = vpack.c.b16 %v2881, %v2881
      %v2946 = vpack.c.b16 %v2882, %v2882
      %v2947 = vpack.c.b16 %v2883, %v2883
      %v2948 = vpack.c.b16 %v2884, %v2884
      %v2949 = vpack.c.b16 %v2885, %v2885
      %v2950 = vpack.c.b16 %v2886, %v2886
      %v2951 = vpack.c.b16 %v2887, %v2887
      %v2952 = vpack.c.b16 %v2888, %v2888
      %v2953 = vpack.c.b16 %v2889, %v2889
      %v2954 = vpack.c.b16 %v2890, %v2890
      %v2955 = vpack.c.b16 %v2891, %v2891
      %v2956 = vpack.c.b16 %v2892, %v2892
      %v2957 = vpack.c.b16 %v2893, %v2893
      %v2958 = vpack.c.b16 %v2894, %v2894
      %v2959 = vpack.c.b16 %v2895, %v2895
      %v2960 = vpack.c.b16 %v2896, %v2896
      %v2961 = vpack.c.b16 %v2897, %v2897
      %v2962 = vpack.c.b16 %v2898, %v2898
      %v2963 = vpack.c.b16 %v2899, %v2899
      %v2964 = vpack.c.b16 %v2900, %v2900
      %v2965 = vpack.c.b16 %v2901, %v2901
      %v2966 = vpack.c.b16 %v2902, %v2902
      %v2967 = vpack.c.b16 %v2903, %v2903
      %v2968 = vpack.c.b16 %v2904, %v2904
      %v2969 = vpack.c.b16 %v2905, %v2905
      %v2970 = vpack.c.b16 %v2906, %v2906
      %v2971 = vpack.c.b16 %v2907, %v2907
      %v2972 = vpack.c.b16 %v2908, %v2908
      %v2973 = vpack.c.b16 %v2909, %v2909
      %v2974 = vpack.c.b16 %v2910, %v2910
      %v2975 = vpack.c.b16 %v2911, %v2911
      %v2976 = vpack.c.b16 %v2912, %v2912
      %v2977 = vpack.c.b16 %v2913, %v2913
      %v2978 = vpack.c.b16 %v2914, %v2914
      %v2979 = vpack.c.b16 %v2915, %v2915
      %v2980 = vpack.c.b16 %v2916, %v2916
      %v2981 = vpack.c.b16 %v2917, %v2917
      %v2982 = vpack.c.b16 %v2918, %v2918
      %v2983 = vpack.c.b16 %v2919, %v2919
      %v2984 = vpack.c.b16 %v2920, %v2920
      %v2985 = vpack.c.b16 %v2921, %v2921
      %v2986 = vpack.c.b16 %v2922, %v2922
      %v2987 = vpack.c.b16 %v2923, %v2923
      %v2988 = vpack.c.b16 %v2924, %v2924
      %v2989 = vpack.c.b16 %v2925, %v2925
      %v2990 = vpack.c.b16 %v2926, %v2926
      %v2991 = vpack.c.b16 %v2927, %v2927
      %v2992 = vpack.c.b16 %v2928, %v2928
      %v2993 = vpack.c.b16 %v2929, %v2929
      %v2994 = vpack.c.b16 %v2930, %v2930
      %v2995 = vpack.c.b16 %v2931, %v2931
      %v2996 = vpack.c.b16 %v2932, %v2932
      %v2997 = vpack.c.b16 %v2933, %v2933
      %v2998 = vpack.c.b16 %v2934, %v2934
      %v2999 = vpack.c.b16 %v2935, %v2935
      %v3000 = vpack.c.b16 %v2936, %v2936
      %v3001 = vpack.c.b16 %v2937, %v2937
      %v3002 = vpack.c.b16 %v2938, %v2938
      %vm3067 = vcmask 125952
      %3068 = vst.msk [vmem:[%s410] sm:$0xf] %vm3067, %v2939
      %3069 = vst.msk [vmem:[%s410 + $0x4] sm:$0xf] %vm3067, %v2940
      %3070 = vst.msk [vmem:[%s410 + $0x8] sm:$0xf] %vm3067, %v2941
      %3071 = vst.msk [vmem:[%s410 + $0xc] sm:$0xf] %vm3067, %v2942
      %3072 = vst.msk [vmem:[%s410 + $0x10] sm:$0xf] %vm3067, %v2943
      %3073 = vst.msk [vmem:[%s410 + $0x14] sm:$0xf] %vm3067, %v2944
      %3074 = vst.msk [vmem:[%s410 + $0x18] sm:$0xf] %vm3067, %v2945
      %3075 = vst.msk [vmem:[%s410 + $0x1c] sm:$0xf] %vm3067, %v2946
      %3076 = vst.msk [vmem:[%s410 + $0x20] sm:$0xf] %vm3067, %v2947
      %3077 = vst.msk [vmem:[%s410 + $0x24] sm:$0xf] %vm3067, %v2948
      %3078 = vst.msk [vmem:[%s410 + $0x28] sm:$0xf] %vm3067, %v2949
      %3079 = vst.msk [vmem:[%s410 + $0x2c] sm:$0xf] %vm3067, %v2950
      %3080 = vst.msk [vmem:[%s410 + $0x30] sm:$0xf] %vm3067, %v2951
      %3081 = vst.msk [vmem:[%s410 + $0x34] sm:$0xf] %vm3067, %v2952
      %3082 = vst.msk [vmem:[%s410 + $0x38] sm:$0xf] %vm3067, %v2953
      %3083 = vst.msk [vmem:[%s410 + $0x3c] sm:$0xf] %vm3067, %v2954
      %3084 = vst.msk [vmem:[%s410 + $0x40] sm:$0xf] %vm3067, %v2955
      %3085 = vst.msk [vmem:[%s410 + $0x44] sm:$0xf] %vm3067, %v2956
      %3086 = vst.msk [vmem:[%s410 + $0x48] sm:$0xf] %vm3067, %v2957
      %3087 = vst.msk [vmem:[%s410 + $0x4c] sm:$0xf] %vm3067, %v2958
      %3088 = vst.msk [vmem:[%s410 + $0x50] sm:$0xf] %vm3067, %v2959
      %3089 = vst.msk [vmem:[%s410 + $0x54] sm:$0xf] %vm3067, %v2960
      %3090 = vst.msk [vmem:[%s410 + $0x58] sm:$0xf] %vm3067, %v2961
      %3091 = vst.msk [vmem:[%s410 + $0x5c] sm:$0xf] %vm3067, %v2962
      %3092 = vst.msk [vmem:[%s410 + $0x60] sm:$0xf] %vm3067, %v2963
      %3093 = vst.msk [vmem:[%s410 + $0x64] sm:$0xf] %vm3067, %v2964
      %3094 = vst.msk [vmem:[%s410 + $0x68] sm:$0xf] %vm3067, %v2965
      %3095 = vst.msk [vmem:[%s410 + $0x6c] sm:$0xf] %vm3067, %v2966
      %3096 = vst.msk [vmem:[%s410 + $0x70] sm:$0xf] %vm3067, %v2967
      %3097 = vst.msk [vmem:[%s410 + $0x74] sm:$0xf] %vm3067, %v2968
      %3098 = vst.msk [vmem:[%s410 + $0x78] sm:$0xf] %vm3067, %v2969
      %3099 = vst.msk [vmem:[%s410 + $0x7c] sm:$0xf] %vm3067, %v2970
      %3100 = vst.msk [vmem:[%s410 + $0x80] sm:$0xf] %vm3067, %v2971
      %3101 = vst.msk [vmem:[%s410 + $0x84] sm:$0xf] %vm3067, %v2972
      %3102 = vst.msk [vmem:[%s410 + $0x88] sm:$0xf] %vm3067, %v2973
      %3103 = vst.msk [vmem:[%s410 + $0x8c] sm:$0xf] %vm3067, %v2974
      %3104 = vst.msk [vmem:[%s410 + $0x90] sm:$0xf] %vm3067, %v2975
      %3105 = vst.msk [vmem:[%s410 + $0x94] sm:$0xf] %vm3067, %v2976
      %3106 = vst.msk [vmem:[%s410 + $0x98] sm:$0xf] %vm3067, %v2977
      %3107 = vst.msk [vmem:[%s410 + $0x9c] sm:$0xf] %vm3067, %v2978
      %3108 = vst.msk [vmem:[%s410 + $0xa0] sm:$0xf] %vm3067, %v2979
      %3109 = vst.msk [vmem:[%s410 + $0xa4] sm:$0xf] %vm3067, %v2980
      %3110 = vst.msk [vmem:[%s410 + $0xa8] sm:$0xf] %vm3067, %v2981
      %3111 = vst.msk [vmem:[%s410 + $0xac] sm:$0xf] %vm3067, %v2982
      %3112 = vst.msk [vmem:[%s410 + $0xb0] sm:$0xf] %vm3067, %v2983
      %3113 = vst.msk [vmem:[%s410 + $0xb4] sm:$0xf] %vm3067, %v2984
      %3114 = vst.msk [vmem:[%s410 + $0xb8] sm:$0xf] %vm3067, %v2985
      %3115 = vst.msk [vmem:[%s410 + $0xbc] sm:$0xf] %vm3067, %v2986
      %3116 = vst.msk [vmem:[%s410 + $0xc0] sm:$0xf] %vm3067, %v2987
      %3117 = vst.msk [vmem:[%s410 + $0xc4] sm:$0xf] %vm3067, %v2988
      %3118 = vst.msk [vmem:[%s410 + $0xc8] sm:$0xf] %vm3067, %v2989
      %3119 = vst.msk [vmem:[%s410 + $0xcc] sm:$0xf] %vm3067, %v2990
      %3120 = vst.msk [vmem:[%s410 + $0xd0] sm:$0xf] %vm3067, %v2991
      %3121 = vst.msk [vmem:[%s410 + $0xd4] sm:$0xf] %vm3067, %v2992
      %3122 = vst.msk [vmem:[%s410 + $0xd8] sm:$0xf] %vm3067, %v2993
      %3123 = vst.msk [vmem:[%s410 + $0xdc] sm:$0xf] %vm3067, %v2994
      %3124 = vst.msk [vmem:[%s410 + $0xe0] sm:$0xf] %vm3067, %v2995
      %3125 = vst.msk [vmem:[%s410 + $0xe4] sm:$0xf] %vm3067, %v2996
      %3126 = vst.msk [vmem:[%s410 + $0xe8] sm:$0xf] %vm3067, %v2997
      %3127 = vst.msk [vmem:[%s410 + $0xec] sm:$0xf] %vm3067, %v2998
      %3128 = vst.msk [vmem:[%s410 + $0xf0] sm:$0xf] %vm3067, %v2999
      %3129 = vst.msk [vmem:[%s410 + $0xf4] sm:$0xf] %vm3067, %v3000
      %3130 = vst.msk [vmem:[%s410 + $0xf8] sm:$0xf] %vm3067, %v3001
      %3131 = vst.msk [vmem:[%s410 + $0xfc] sm:$0xf] %vm3067, %v3002
      %s3132 = smul.u32 32, %s24
      %p3133 = scmp.lt.s32.totalorder %s23, 1
      %s3134 = scalar_select %p3133, %s23, 1
      %p3135 = scmp.lt.s32.totalorder %s3132, 31
      %s3136 = scalar_select %p3135, %s3132, 31
      %s3137 = smul.addr %s3136, 2
      %s3138 = smul.addr %s3134, 64
      %s3139 = sadd.s32 %s3137, %s3138
      %s3140 = smul.addr %s3139, 4
      %s3141 = scalar_lea.vmem %s8, %s3140
      // Predicated region
      $region53: #{decoder_block_forward.1} parent=51 // pred_check
        %p3142 = pneg %p241
      $region54: #{decoder_block_forward.1} parent=51 // pred_check_branch
        %3144 = sbr.rel (%p3142) target = $region56
      $region55: #{decoder_block_forward.1} parent=51 // pred_region
        %s3145 = smul.u32 32, %s24
      $region56: #{decoder_block_forward.1} parent=51 // pred_fallthru
        _
    $region52: #{decoder_block_forward.1} parent=5 // pred_fallthru
      _
    %p3146 = scmp.le.s32.totalorder 2, %s14
    // Predicated region
    $region57: #{decoder_block_forward.1} parent=5 // pred_check
      %p3147 = pneg %p3146
    $region58: #{decoder_block_forward.1} parent=5 // pred_check_branch
      %3149 = sbr.rel (%p3147) target = $region60
    $region59: #{decoder_block_forward.1} parent=5 // pred_region
      %s3150 = ssub.s32 %s14, 2
      // Predicated region
      $region61: #{decoder_block_forward.1} parent=59 // pred_check
        %p3151 = pneg %p247
      $region62: #{decoder_block_forward.1} parent=59 // pred_check_branch
        %3153 = sbr.rel (%p3151) target = $region64
      $region63: #{decoder_block_forward.1} parent=59 // pred_region
        %s3154 = smul.u32 32, %s26
        %p3155 = scmp.lt.s32.totalorder %s25, 1
        %s3156 = scalar_select %p3155, %s25, 1
        %p3157 = scmp.lt.s32.totalorder %s3154, 31
        %s3158 = scalar_select %p3157, %s3154, 31
        %s3159 = smul.addr %s3158, 2
        %s3160 = smul.addr %s3156, 64
        %s3161 = sadd.s32 %s3159, %s3160
        %s3162 = smul.addr %s3161, 4
        %s3163 = scalar_lea.vmem %s8, %s3162
      $region64: #{decoder_block_forward.1} parent=59 // pred_fallthru
        _
    $region60: #{decoder_block_forward.1} parent=5 // pred_fallthru
      _
  $region6: #{decoder_block_forward.1} parent=0 // loop_footer
    %s18 = sadd.s32 1, %s14
  $region7: #{decoder_block_forward.1} parent=0 // loop_footer_branch
    %13 = sbr.rel target = $region3
  $region8: #{decoder_block_forward.1} parent=0 // loop_exit
    _

</llo_original>
